<compile_context>
chip_gen: v5e
topology: v5e:2x2
jax: 0.10.0
libtpu: 0.0.40
codegen_flags: <defaults>
</compile_context>

<pallas_src>
import math

import jax
import jax.numpy as jnp
from jax.experimental import pallas as pl
from jax.experimental.pallas import tpu as pltpu

# ---------------- small synthetic "bert.config" ----------------
B, S = 2, 8          # batch, seq_len
H = 32               # hidden_size
NH = 2               # num_attention_heads
DH = H // NH         # head dim
FF = 64              # intermediate_size
L = 2                # num_hidden_layers
VOCAB = 50
TYPE_VOCAB = 2
MAX_POS = 16
OUT_DIM = 3          # WrimeBert output_dim
OUT_PAD = 128        # lane-dense classifier output width (sliced to OUT_DIM outside)
LN_EPS = 1e-12
BS = B * S


# ---------------- fully fused Pallas kernel ----------------
def _wrime_bert_kernel(
    x_ref, bias_ref, eg_ref, eb_ref,
    wqkv_ref, bqkv_ref, wo_ref, bo_ref, ln1g_ref, ln1b_ref,
    w1_ref, b1_ref, w2_ref, b2_ref, ln2g_ref, ln2b_ref,
    poolw_ref, poolb_ref, clsw_ref, clsb_ref,
    out_ref,
):
    scale = 1.0 / math.sqrt(DH)
    inv_sqrt2 = 1.0 / math.sqrt(2.0)

    def layernorm(x, g, b):
        mu = jnp.mean(x, axis=-1, keepdims=True)
        xc = x - mu
        var = jnp.mean(xc * xc, axis=-1, keepdims=True)
        return (xc * jax.lax.rsqrt(var + LN_EPS)) * g + b

    # embedding LayerNorm (no zeros-residual DMA)
    x = layernorm(x_ref[...], eg_ref[...], eb_ref[...])          # (BS, H)
    bias = bias_ref[...][:, None, :]                             # (B, 1, S) additive mask

    for l in range(L):                                           # static unroll; weights stay in VMEM
        # fused QKV projection: one (BS,H) x (H,3H) matmul
        qkv = jnp.dot(x, wqkv_ref[l],
                      preferred_element_type=jnp.float32) + bqkv_ref[l]   # (BS, 3H)
        wo = wo_ref[l]                                           # (H, H)

        attn_out = jnp.zeros((BS, H), jnp.float32)
        for h in range(NH):                                      # static unroll over heads
            q = qkv[:, h * DH:(h + 1) * DH].reshape(B, S, DH)
            k = qkv[:, H + h * DH:H + (h + 1) * DH].reshape(B, S, DH)
            v = qkv[:, 2 * H + h * DH:2 * H + (h + 1) * DH].reshape(B, S, DH)

            s = jnp.einsum('bqd,bkd->bqk', q, k,
                           preferred_element_type=jnp.float32) * scale + bias
            s = s - jnp.max(s, axis=-1, keepdims=True)
            p = jnp.exp(s)
            p = p * pl.reciprocal(jnp.sum(p, axis=-1, keepdims=True), approx=True)

            ctx = jnp.einsum('bqk,bkd->bqd', p, v,
                             preferred_element_type=jnp.float32).reshape(BS, DH)
            # head merge folded into output projection: accumulate per-head partial products
            attn_out = attn_out + jnp.dot(ctx, wo[h * DH:(h + 1) * DH, :],
                                          preferred_element_type=jnp.float32)
        attn_out = attn_out + bo_ref[l]

        x = layernorm(attn_out + x, ln1g_ref[l], ln1b_ref[l])

        h1 = jnp.dot(x, w1_ref[l], preferred_element_type=jnp.float32) + b1_ref[l]
        h1 = 0.5 * h1 * (1.0 + jax.lax.erf(h1 * inv_sqrt2))      # exact (erf) GELU, as in HF BERT
        ff = jnp.dot(h1, w2_ref[l], preferred_element_type=jnp.float32) + b2_ref[l]
        x = layernorm(ff + x, ln2g_ref[l], ln2b_ref[l])

    # BERT pooler on the CLS token, then classifier head (lane-padded output)
    cls = x.reshape(B, S, H)[:, 0, :]                            # (B, H)
    pooled = jnp.tanh(jnp.dot(cls, poolw_ref[...],
                              preferred_element_type=jnp.float32) + poolb_ref[...])
    # TODO(synk): nn.Dropout is identity in eval/inference mode; no-op here.
    out_ref[...] = (jnp.dot(pooled, clsw_ref[...],
                            preferred_element_type=jnp.float32) + clsb_ref[...])


# ---------------- parameters (deterministic synthetic init) ----------------
def init_params(key):
    def nrm(k, shape):
        return 0.02 * jax.random.normal(k, shape, dtype=jnp.float32)

    keys = iter(jax.random.split(key, 5 + 6 * L))
    p = {
        "word_emb": nrm(next(keys), (VOCAB, H)),
        "pos_emb": nrm(next(keys), (MAX_POS, H)),
        "type_emb": nrm(next(keys), (TYPE_VOCAB, H)),
        "emb_ln_g": jnp.ones((1, H), jnp.float32),
        "emb_ln_b": jnp.zeros((1, H), jnp.float32),
        "pool_w": nrm(next(keys), (H, H)),
        "pool_b": jnp.zeros((1, H), jnp.float32),
    }
    wqkv, wo, w1, w2 = [], [], [], []
    for _ in range(L):
        wq = nrm(next(keys), (H, H))
        wk = nrm(next(keys), (H, H))
        wv = nrm(next(keys), (H, H))
        wqkv.append(jnp.concatenate([wq, wk, wv], axis=1))       # fused (H, 3H)
        wo.append(nrm(next(keys), (H, H)))
        w1.append(nrm(next(keys), (H, FF)))
        w2.append(nrm(next(keys), (FF, H)))
    p["wqkv"] = jnp.stack(wqkv)                                  # (L, H, 3H)
    p["bqkv"] = jnp.zeros((L, 1, 3 * H), jnp.float32)
    p["wo"] = jnp.stack(wo)                                      # (L, H, H)
    p["bo"] = jnp.zeros((L, 1, H), jnp.float32)
    p["ln1_g"] = jnp.ones((L, 1, H), jnp.float32)
    p["ln1_b"] = jnp.zeros((L, 1, H), jnp.float32)
    p["w1"] = jnp.stack(w1)                                      # (L, H, FF)
    p["b1"] = jnp.zeros((L, 1, FF), jnp.float32)
    p["w2"] = jnp.stack(w2)                                      # (L, FF, H)
    p["b2"] = jnp.zeros((L, 1, H), jnp.float32)
    p["ln2_g"] = jnp.ones((L, 1, H), jnp.float32)
    p["ln2_b"] = jnp.zeros((L, 1, H), jnp.float32)

    cls_w = nrm(next(keys), (H, OUT_DIM))
    p["cls_w_pad"] = jnp.zeros((H, OUT_PAD), jnp.float32).at[:, :OUT_DIM].set(cls_w)
    p["cls_b_pad"] = jnp.zeros((1, OUT_PAD), jnp.float32)
    return p


# ---------------- forward (WrimeBert.forward) ----------------
def wrime_bert_forward(params, input_ids, token_type_ids, attention_mask):
    # embeddings (gathers are plain-JAX glue)
    pos_ids = jnp.arange(S)
    x = (params["word_emb"][input_ids]
         + params["pos_emb"][pos_ids][None, :, :]
         + params["type_emb"][token_type_ids])
    x = x.reshape(BS, H).astype(jnp.float32)

    # additive attention-mask bias, shape (B, S)
    mask_bias = (1.0 - attention_mask.astype(jnp.float32)) * -1e9

    vmem = pl.BlockSpec(memory_space=pltpu.MemorySpace.VMEM)
    args = (
        x, mask_bias,
        params["emb_ln_g"], params["emb_ln_b"],
        params["wqkv"], params["bqkv"],
        params["wo"], params["bo"],
        params["ln1_g"], params["ln1_b"],
        params["w1"], params["b1"],
        params["w2"], params["b2"],
        params["ln2_g"], params["ln2_b"],
        params["pool_w"], params["pool_b"],
        params["cls_w_pad"], params["cls_b_pad"],
    )
    logits_pad = pl.pallas_call(
        _wrime_bert_kernel,
        out_shape=jax.ShapeDtypeStruct((B, OUT_PAD), jnp.float32),
        in_specs=[vmem] * len(args),
        out_specs=vmem,
    )(*args)
    return logits_pad[:, :OUT_DIM]                                # (B, OUT_DIM)


if __name__ == "__main__":
    key = jax.random.PRNGKey(0)
    k_param, k_ids = jax.random.split(key)
    params = init_params(k_param)

    input_ids = jax.random.randint(k_ids, (B, S), 0, VOCAB, dtype=jnp.int32)
    token_type_ids = jnp.zeros((B, S), dtype=jnp.int32)
    attention_mask = jnp.ones((B, S), dtype=jnp.int32)

    logits = wrime_bert_forward(params, input_ids, token_type_ids, attention_mask)
    logits = jax.block_until_ready(logits)
    assert logits.shape == (B, OUT_DIM)
    assert bool(jnp.all(jnp.isfinite(logits)))
    print("KERNEL_OK")
</pallas_src>

<mosaic_0001>
module attributes {stable_mosaic.version = 11 : i64} {
  func.func @_wrime_bert_kernel(%arg0: memref<16x32xf32, #tpu.memory_space<vmem>>, %arg1: memref<2x8xf32, #tpu.memory_space<vmem>>, %arg2: memref<1x32xf32, #tpu.memory_space<vmem>>, %arg3: memref<1x32xf32, #tpu.memory_space<vmem>>, %arg4: memref<2x32x96xf32, #tpu.memory_space<vmem>>, %arg5: memref<2x1x96xf32, #tpu.memory_space<vmem>>, %arg6: memref<2x32x32xf32, #tpu.memory_space<vmem>>, %arg7: memref<2x1x32xf32, #tpu.memory_space<vmem>>, %arg8: memref<2x1x32xf32, #tpu.memory_space<vmem>>, %arg9: memref<2x1x32xf32, #tpu.memory_space<vmem>>, %arg10: memref<2x32x64xf32, #tpu.memory_space<vmem>>, %arg11: memref<2x1x64xf32, #tpu.memory_space<vmem>>, %arg12: memref<2x64x32xf32, #tpu.memory_space<vmem>>, %arg13: memref<2x1x32xf32, #tpu.memory_space<vmem>>, %arg14: memref<2x1x32xf32, #tpu.memory_space<vmem>>, %arg15: memref<2x1x32xf32, #tpu.memory_space<vmem>>, %arg16: memref<32x32xf32, #tpu.memory_space<vmem>>, %arg17: memref<1x32xf32, #tpu.memory_space<vmem>>, %arg18: memref<32x128xf32, #tpu.memory_space<vmem>>, %arg19: memref<1x128xf32, #tpu.memory_space<vmem>>, %arg20: memref<2x128xf32, #tpu.memory_space<vmem>>) attributes {dimension_semantics = [], scalar_prefetch = 0 : i64, scratch_operands = 0 : i64, tpu.core_type = #tpu.core_type<tc>} {
    %c0 = arith.constant 0 : index
    %c0_0 = arith.constant 0 : index
    %0 = vector.load %arg0[%c0, %c0_0] : memref<16x32xf32, #tpu.memory_space<vmem>>, vector<16x32xf32>
    %c0_1 = arith.constant 0 : index
    %c0_2 = arith.constant 0 : index
    %1 = vector.load %arg2[%c0_1, %c0_2] : memref<1x32xf32, #tpu.memory_space<vmem>>, vector<1x32xf32>
    %c0_3 = arith.constant 0 : index
    %c0_4 = arith.constant 0 : index
    %2 = vector.load %arg3[%c0_3, %c0_4] : memref<1x32xf32, #tpu.memory_space<vmem>>, vector<1x32xf32>
    %cst = arith.constant dense<0.000000e+00> : vector<16xf32>
    %3 = vector.multi_reduction <add>, %0, %cst [1] : vector<16x32xf32> to vector<16xf32>
    %4 = vector.shape_cast %3 : vector<16xf32> to vector<16x1xf32>
    %cst_5 = arith.constant 3.200000e+01 : f32
    %5 = vector.broadcast %cst_5 : f32 to vector<16x1xf32>
    %6 = arith.divf %4, %5 : vector<16x1xf32>
    %7 = vector.broadcast %6 : vector<16x1xf32> to vector<16x32xf32>
    %8 = arith.subf %0, %7 : vector<16x32xf32>
    %9 = arith.mulf %8, %8 : vector<16x32xf32>
    %cst_6 = arith.constant dense<0.000000e+00> : vector<16xf32>
    %10 = vector.multi_reduction <add>, %9, %cst_6 [1] : vector<16x32xf32> to vector<16xf32>
    %11 = vector.shape_cast %10 : vector<16xf32> to vector<16x1xf32>
    %cst_7 = arith.constant 3.200000e+01 : f32
    %12 = vector.broadcast %cst_7 : f32 to vector<16x1xf32>
    %13 = arith.divf %11, %12 : vector<16x1xf32>
    %cst_8 = arith.constant 9.99999996E-13 : f32
    %14 = vector.broadcast %cst_8 : f32 to vector<16x1xf32>
    %15 = arith.addf %13, %14 : vector<16x1xf32>
    %16 = math.rsqrt %15 : vector<16x1xf32>
    %17 = vector.broadcast %16 : vector<16x1xf32> to vector<16x32xf32>
    %18 = arith.mulf %8, %17 : vector<16x32xf32>
    %19 = vector.broadcast %1 : vector<1x32xf32> to vector<16x32xf32>
    %20 = arith.mulf %18, %19 : vector<16x32xf32>
    %21 = vector.broadcast %2 : vector<1x32xf32> to vector<16x32xf32>
    %22 = arith.addf %20, %21 : vector<16x32xf32>
    %c0_9 = arith.constant 0 : index
    %c0_10 = arith.constant 0 : index
    %23 = vector.load %arg1[%c0_9, %c0_10] : memref<2x8xf32, #tpu.memory_space<vmem>>, vector<2x8xf32>
    %24 = vector.shape_cast %23 : vector<2x8xf32> to vector<2x1x8xf32>
    %c0_11 = arith.constant 0 : index
    %c0_12 = arith.constant 0 : index
    %c0_13 = arith.constant 0 : index
    %25 = vector.load %arg4[%c0_11, %c0_12, %c0_13] : memref<2x32x96xf32, #tpu.memory_space<vmem>>, vector<1x32x96xf32>
    %26 = vector.shape_cast %25 : vector<1x32x96xf32> to vector<32x96xf32>
    %cst_14 = arith.constant dense<0.000000e+00> : vector<16x96xf32>
    %27 = tpu.matmul %22, %26, %cst_14 {dimension_numbers = #tpu.dot_dimension_numbers<[1], [0], [0], [1], [0, 0, 1, 1], [], []>} : vector<16x32xf32>, vector<32x96xf32>, vector<16x96xf32> -> vector<16x96xf32>
    %c0_15 = arith.constant 0 : index
    %c0_16 = arith.constant 0 : index
    %c0_17 = arith.constant 0 : index
    %28 = vector.load %arg5[%c0_15, %c0_16, %c0_17] : memref<2x1x96xf32, #tpu.memory_space<vmem>>, vector<1x1x96xf32>
    %29 = vector.shape_cast %28 : vector<1x1x96xf32> to vector<1x96xf32>
    %30 = vector.broadcast %29 : vector<1x96xf32> to vector<16x96xf32>
    %31 = arith.addf %27, %30 : vector<16x96xf32>
    %c0_18 = arith.constant 0 : index
    %c0_19 = arith.constant 0 : index
    %c0_20 = arith.constant 0 : index
    %32 = vector.load %arg6[%c0_18, %c0_19, %c0_20] : memref<2x32x32xf32, #tpu.memory_space<vmem>>, vector<1x32x32xf32>
    %33 = vector.shape_cast %32 : vector<1x32x32xf32> to vector<32x32xf32>
    %cst_21 = arith.constant 0.000000e+00 : f32
    %34 = vector.broadcast %cst_21 : f32 to vector<16x32xf32>
    %35 = vector.extract_strided_slice %31 {offsets = [0, 0], sizes = [16, 16], strides = [1, 1]} : vector<16x96xf32> to vector<16x16xf32>
    %36 = vector.shape_cast %35 : vector<16x16xf32> to vector<2x8x16xf32>
    %37 = vector.extract_strided_slice %31 {offsets = [0, 32], sizes = [16, 16], strides = [1, 1]} : vector<16x96xf32> to vector<16x16xf32>
    %38 = vector.shape_cast %37 : vector<16x16xf32> to vector<2x8x16xf32>
    %39 = vector.extract_strided_slice %31 {offsets = [0, 64], sizes = [16, 16], strides = [1, 1]} : vector<16x96xf32> to vector<16x16xf32>
    %40 = vector.shape_cast %39 : vector<16x16xf32> to vector<2x8x16xf32>
    "tpu.trace_start"() <{level = 10 : i32, message = "bqd,bkd->bqk"}> : () -> ()
    %cst_22 = arith.constant dense<0.000000e+00> : vector<2x8x8xf32>
    %41 = tpu.matmul %36, %38, %cst_22 {dimension_numbers = #tpu.dot_dimension_numbers<[2], [2], [1], [1], [0, 0, 0, 1, 1, 1], [0], [0]>} : vector<2x8x16xf32>, vector<2x8x16xf32>, vector<2x8x8xf32> -> vector<2x8x8xf32>
    "tpu.trace_stop"() : () -> ()
    %cst_23 = arith.constant 2.500000e-01 : f32
    %42 = vector.broadcast %cst_23 : f32 to vector<2x8x8xf32>
    %43 = arith.mulf %41, %42 : vector<2x8x8xf32>
    %44 = vector.broadcast %24 : vector<2x1x8xf32> to vector<2x8x8xf32>
    %45 = arith.addf %43, %44 : vector<2x8x8xf32>
    %cst_24 = arith.constant dense<0xFF800000> : vector<2x8xf32>
    %46 = vector.multi_reduction <maximumf>, %45, %cst_24 [2] : vector<2x8x8xf32> to vector<2x8xf32>
    %47 = vector.shape_cast %46 : vector<2x8xf32> to vector<2x8x1xf32>
    %48 = vector.broadcast %47 : vector<2x8x1xf32> to vector<2x8x8xf32>
    %49 = arith.subf %45, %48 : vector<2x8x8xf32>
    %50 = math.exp %49 : vector<2x8x8xf32>
    %cst_25 = arith.constant dense<0.000000e+00> : vector<2x8xf32>
    %51 = vector.multi_reduction <add>, %50, %cst_25 [2] : vector<2x8x8xf32> to vector<2x8xf32>
    %52 = vector.shape_cast %51 : vector<2x8xf32> to vector<2x8x1xf32>
    %53 = tpu.reciprocal %52 {approx = true} : vector<2x8x1xf32> -> vector<2x8x1xf32>
    %54 = vector.broadcast %53 : vector<2x8x1xf32> to vector<2x8x8xf32>
    %55 = arith.mulf %50, %54 : vector<2x8x8xf32>
    "tpu.trace_start"() <{level = 10 : i32, message = "bqk,bkd->bqd"}> : () -> ()
    %cst_26 = arith.constant dense<0.000000e+00> : vector<2x8x16xf32>
    %56 = tpu.matmul %55, %40, %cst_26 {dimension_numbers = #tpu.dot_dimension_numbers<[2], [1], [1], [2], [0, 0, 0, 1, 1, 2], [0], [0]>} : vector<2x8x8xf32>, vector<2x8x16xf32>, vector<2x8x16xf32> -> vector<2x8x16xf32>
    "tpu.trace_stop"() : () -> ()
    %57 = vector.shape_cast %56 : vector<2x8x16xf32> to vector<16x16xf32>
    %58 = vector.extract_strided_slice %33 {offsets = [0, 0], sizes = [16, 32], strides = [1, 1]} : vector<32x32xf32> to vector<16x32xf32>
    %cst_27 = arith.constant dense<0.000000e+00> : vector<16x32xf32>
    %59 = tpu.matmul %57, %58, %cst_27 {dimension_numbers = #tpu.dot_dimension_numbers<[1], [0], [0], [1], [0, 0, 1, 1], [], []>} : vector<16x16xf32>, vector<16x32xf32>, vector<16x32xf32> -> vector<16x32xf32>
    %60 = arith.addf %34, %59 : vector<16x32xf32>
    %61 = vector.extract_strided_slice %31 {offsets = [0, 16], sizes = [16, 16], strides = [1, 1]} : vector<16x96xf32> to vector<16x16xf32>
    %62 = vector.shape_cast %61 : vector<16x16xf32> to vector<2x8x16xf32>
    %63 = vector.extract_strided_slice %31 {offsets = [0, 48], sizes = [16, 16], strides = [1, 1]} : vector<16x96xf32> to vector<16x16xf32>
    %64 = vector.shape_cast %63 : vector<16x16xf32> to vector<2x8x16xf32>
    %65 = vector.extract_strided_slice %31 {offsets = [0, 80], sizes = [16, 16], strides = [1, 1]} : vector<16x96xf32> to vector<16x16xf32>
    %66 = vector.shape_cast %65 : vector<16x16xf32> to vector<2x8x16xf32>
    "tpu.trace_start"() <{level = 10 : i32, message = "bqd,bkd->bqk"}> : () -> ()
    %cst_28 = arith.constant dense<0.000000e+00> : vector<2x8x8xf32>
    %67 = tpu.matmul %62, %64, %cst_28 {dimension_numbers = #tpu.dot_dimension_numbers<[2], [2], [1], [1], [0, 0, 0, 1, 1, 1], [0], [0]>} : vector<2x8x16xf32>, vector<2x8x16xf32>, vector<2x8x8xf32> -> vector<2x8x8xf32>
    "tpu.trace_stop"() : () -> ()
    %cst_29 = arith.constant 2.500000e-01 : f32
    %68 = vector.broadcast %cst_29 : f32 to vector<2x8x8xf32>
    %69 = arith.mulf %67, %68 : vector<2x8x8xf32>
    %70 = vector.broadcast %24 : vector<2x1x8xf32> to vector<2x8x8xf32>
    %71 = arith.addf %69, %70 : vector<2x8x8xf32>
    %cst_30 = arith.constant dense<0xFF800000> : vector<2x8xf32>
    %72 = vector.multi_reduction <maximumf>, %71, %cst_30 [2] : vector<2x8x8xf32> to vector<2x8xf32>
    %73 = vector.shape_cast %72 : vector<2x8xf32> to vector<2x8x1xf32>
    %74 = vector.broadcast %73 : vector<2x8x1xf32> to vector<2x8x8xf32>
    %75 = arith.subf %71, %74 : vector<2x8x8xf32>
    %76 = math.exp %75 : vector<2x8x8xf32>
    %cst_31 = arith.constant dense<0.000000e+00> : vector<2x8xf32>
    %77 = vector.multi_reduction <add>, %76, %cst_31 [2] : vector<2x8x8xf32> to vector<2x8xf32>
    %78 = vector.shape_cast %77 : vector<2x8xf32> to vector<2x8x1xf32>
    %79 = tpu.reciprocal %78 {approx = true} : vector<2x8x1xf32> -> vector<2x8x1xf32>
    %80 = vector.broadcast %79 : vector<2x8x1xf32> to vector<2x8x8xf32>
    %81 = arith.mulf %76, %80 : vector<2x8x8xf32>
    "tpu.trace_start"() <{level = 10 : i32, message = "bqk,bkd->bqd"}> : () -> ()
    %cst_32 = arith.constant dense<0.000000e+00> : vector<2x8x16xf32>
    %82 = tpu.matmul %81, %66, %cst_32 {dimension_numbers = #tpu.dot_dimension_numbers<[2], [1], [1], [2], [0, 0, 0, 1, 1, 2], [0], [0]>} : vector<2x8x8xf32>, vector<2x8x16xf32>, vector<2x8x16xf32> -> vector<2x8x16xf32>
    "tpu.trace_stop"() : () -> ()
    %83 = vector.shape_cast %82 : vector<2x8x16xf32> to vector<16x16xf32>
    %84 = vector.extract_strided_slice %33 {offsets = [16, 0], sizes = [16, 32], strides = [1, 1]} : vector<32x32xf32> to vector<16x32xf32>
    %cst_33 = arith.constant dense<0.000000e+00> : vector<16x32xf32>
    %85 = tpu.matmul %83, %84, %cst_33 {dimension_numbers = #tpu.dot_dimension_numbers<[1], [0], [0], [1], [0, 0, 1, 1], [], []>} : vector<16x16xf32>, vector<16x32xf32>, vector<16x32xf32> -> vector<16x32xf32>
    %86 = arith.addf %60, %85 : vector<16x32xf32>
    %c0_34 = arith.constant 0 : index
    %c0_35 = arith.constant 0 : index
    %c0_36 = arith.constant 0 : index
    %87 = vector.load %arg7[%c0_34, %c0_35, %c0_36] : memref<2x1x32xf32, #tpu.memory_space<vmem>>, vector<1x1x32xf32>
    %88 = vector.shape_cast %87 : vector<1x1x32xf32> to vector<1x32xf32>
    %89 = vector.broadcast %88 : vector<1x32xf32> to vector<16x32xf32>
    %90 = arith.addf %86, %89 : vector<16x32xf32>
    %91 = arith.addf %90, %22 : vector<16x32xf32>
    %c0_37 = arith.constant 0 : index
    %c0_38 = arith.constant 0 : index
    %c0_39 = arith.constant 0 : index
    %92 = vector.load %arg8[%c0_37, %c0_38, %c0_39] : memref<2x1x32xf32, #tpu.memory_space<vmem>>, vector<1x1x32xf32>
    %93 = vector.shape_cast %92 : vector<1x1x32xf32> to vector<1x32xf32>
    %c0_40 = arith.constant 0 : index
    %c0_41 = arith.constant 0 : index
    %c0_42 = arith.constant 0 : index
    %94 = vector.load %arg9[%c0_40, %c0_41, %c0_42] : memref<2x1x32xf32, #tpu.memory_space<vmem>>, vector<1x1x32xf32>
    %95 = vector.shape_cast %94 : vector<1x1x32xf32> to vector<1x32xf32>
    %cst_43 = arith.constant dense<0.000000e+00> : vector<16xf32>
    %96 = vector.multi_reduction <add>, %91, %cst_43 [1] : vector<16x32xf32> to vector<16xf32>
    %97 = vector.shape_cast %96 : vector<16xf32> to vector<16x1xf32>
    %cst_44 = arith.constant 3.200000e+01 : f32
    %98 = vector.broadcast %cst_44 : f32 to vector<16x1xf32>
    %99 = arith.divf %97, %98 : vector<16x1xf32>
    %100 = vector.broadcast %99 : vector<16x1xf32> to vector<16x32xf32>
    %101 = arith.subf %91, %100 : vector<16x32xf32>
    %102 = arith.mulf %101, %101 : vector<16x32xf32>
    %cst_45 = arith.constant dense<0.000000e+00> : vector<16xf32>
    %103 = vector.multi_reduction <add>, %102, %cst_45 [1] : vector<16x32xf32> to vector<16xf32>
    %104 = vector.shape_cast %103 : vector<16xf32> to vector<16x1xf32>
    %cst_46 = arith.constant 3.200000e+01 : f32
    %105 = vector.broadcast %cst_46 : f32 to vector<16x1xf32>
    %106 = arith.divf %104, %105 : vector<16x1xf32>
    %cst_47 = arith.constant 9.99999996E-13 : f32
    %107 = vector.broadcast %cst_47 : f32 to vector<16x1xf32>
    %108 = arith.addf %106, %107 : vector<16x1xf32>
    %109 = math.rsqrt %108 : vector<16x1xf32>
    %110 = vector.broadcast %109 : vector<16x1xf32> to vector<16x32xf32>
    %111 = arith.mulf %101, %110 : vector<16x32xf32>
    %112 = vector.broadcast %93 : vector<1x32xf32> to vector<16x32xf32>
    %113 = arith.mulf %111, %112 : vector<16x32xf32>
    %114 = vector.broadcast %95 : vector<1x32xf32> to vector<16x32xf32>
    %115 = arith.addf %113, %114 : vector<16x32xf32>
    %c0_48 = arith.constant 0 : index
    %c0_49 = arith.constant 0 : index
    %c0_50 = arith.constant 0 : index
    %116 = vector.load %arg10[%c0_48, %c0_49, %c0_50] : memref<2x32x64xf32, #tpu.memory_space<vmem>>, vector<1x32x64xf32>
    %117 = vector.shape_cast %116 : vector<1x32x64xf32> to vector<32x64xf32>
    %cst_51 = arith.constant dense<0.000000e+00> : vector<16x64xf32>
    %118 = tpu.matmul %115, %117, %cst_51 {dimension_numbers = #tpu.dot_dimension_numbers<[1], [0], [0], [1], [0, 0, 1, 1], [], []>} : vector<16x32xf32>, vector<32x64xf32>, vector<16x64xf32> -> vector<16x64xf32>
    %c0_52 = arith.constant 0 : index
    %c0_53 = arith.constant 0 : index
    %c0_54 = arith.constant 0 : index
    %119 = vector.load %arg11[%c0_52, %c0_53, %c0_54] : memref<2x1x64xf32, #tpu.memory_space<vmem>>, vector<1x1x64xf32>
    %120 = vector.shape_cast %119 : vector<1x1x64xf32> to vector<1x64xf32>
    %121 = vector.broadcast %120 : vector<1x64xf32> to vector<16x64xf32>
    %122 = arith.addf %118, %121 : vector<16x64xf32>
    %cst_55 = arith.constant 5.000000e-01 : f32
    %123 = vector.broadcast %cst_55 : f32 to vector<16x64xf32>
    %124 = arith.mulf %123, %122 : vector<16x64xf32>
    %cst_56 = arith.constant 0.707106769 : f32
    %125 = vector.broadcast %cst_56 : f32 to vector<16x64xf32>
    %126 = arith.mulf %122, %125 : vector<16x64xf32>
    %127 = math.erf %126 : vector<16x64xf32>
    %cst_57 = arith.constant 1.000000e+00 : f32
    %128 = vector.broadcast %cst_57 : f32 to vector<16x64xf32>
    %129 = arith.addf %128, %127 : vector<16x64xf32>
    %130 = arith.mulf %124, %129 : vector<16x64xf32>
    %c0_58 = arith.constant 0 : index
    %c0_59 = arith.constant 0 : index
    %c0_60 = arith.constant 0 : index
    %131 = vector.load %arg12[%c0_58, %c0_59, %c0_60] : memref<2x64x32xf32, #tpu.memory_space<vmem>>, vector<1x64x32xf32>
    %132 = vector.shape_cast %131 : vector<1x64x32xf32> to vector<64x32xf32>
    %cst_61 = arith.constant dense<0.000000e+00> : vector<16x32xf32>
    %133 = tpu.matmul %130, %132, %cst_61 {dimension_numbers = #tpu.dot_dimension_numbers<[1], [0], [0], [1], [0, 0, 1, 1], [], []>} : vector<16x64xf32>, vector<64x32xf32>, vector<16x32xf32> -> vector<16x32xf32>
    %c0_62 = arith.constant 0 : index
    %c0_63 = arith.constant 0 : index
    %c0_64 = arith.constant 0 : index
    %134 = vector.load %arg13[%c0_62, %c0_63, %c0_64] : memref<2x1x32xf32, #tpu.memory_space<vmem>>, vector<1x1x32xf32>
    %135 = vector.shape_cast %134 : vector<1x1x32xf32> to vector<1x32xf32>
    %136 = vector.broadcast %135 : vector<1x32xf32> to vector<16x32xf32>
    %137 = arith.addf %133, %136 : vector<16x32xf32>
    %138 = arith.addf %137, %115 : vector<16x32xf32>
    %c0_65 = arith.constant 0 : index
    %c0_66 = arith.constant 0 : index
    %c0_67 = arith.constant 0 : index
    %139 = vector.load %arg14[%c0_65, %c0_66, %c0_67] : memref<2x1x32xf32, #tpu.memory_space<vmem>>, vector<1x1x32xf32>
    %140 = vector.shape_cast %139 : vector<1x1x32xf32> to vector<1x32xf32>
    %c0_68 = arith.constant 0 : index
    %c0_69 = arith.constant 0 : index
    %c0_70 = arith.constant 0 : index
    %141 = vector.load %arg15[%c0_68, %c0_69, %c0_70] : memref<2x1x32xf32, #tpu.memory_space<vmem>>, vector<1x1x32xf32>
    %142 = vector.shape_cast %141 : vector<1x1x32xf32> to vector<1x32xf32>
    %cst_71 = arith.constant dense<0.000000e+00> : vector<16xf32>
    %143 = vector.multi_reduction <add>, %138, %cst_71 [1] : vector<16x32xf32> to vector<16xf32>
    %144 = vector.shape_cast %143 : vector<16xf32> to vector<16x1xf32>
    %cst_72 = arith.constant 3.200000e+01 : f32
    %145 = vector.broadcast %cst_72 : f32 to vector<16x1xf32>
    %146 = arith.divf %144, %145 : vector<16x1xf32>
    %147 = vector.broadcast %146 : vector<16x1xf32> to vector<16x32xf32>
    %148 = arith.subf %138, %147 : vector<16x32xf32>
    %149 = arith.mulf %148, %148 : vector<16x32xf32>
    %cst_73 = arith.constant dense<0.000000e+00> : vector<16xf32>
    %150 = vector.multi_reduction <add>, %149, %cst_73 [1] : vector<16x32xf32> to vector<16xf32>
    %151 = vector.shape_cast %150 : vector<16xf32> to vector<16x1xf32>
    %cst_74 = arith.constant 3.200000e+01 : f32
    %152 = vector.broadcast %cst_74 : f32 to vector<16x1xf32>
    %153 = arith.divf %151, %152 : vector<16x1xf32>
    %cst_75 = arith.constant 9.99999996E-13 : f32
    %154 = vector.broadcast %cst_75 : f32 to vector<16x1xf32>
    %155 = arith.addf %153, %154 : vector<16x1xf32>
    %156 = math.rsqrt %155 : vector<16x1xf32>
    %157 = vector.broadcast %156 : vector<16x1xf32> to vector<16x32xf32>
    %158 = arith.mulf %148, %157 : vector<16x32xf32>
    %159 = vector.broadcast %140 : vector<1x32xf32> to vector<16x32xf32>
    %160 = arith.mulf %158, %159 : vector<16x32xf32>
    %161 = vector.broadcast %142 : vector<1x32xf32> to vector<16x32xf32>
    %162 = arith.addf %160, %161 : vector<16x32xf32>
    %c1 = arith.constant 1 : index
    %c0_76 = arith.constant 0 : index
    %c0_77 = arith.constant 0 : index
    %163 = vector.load %arg4[%c1, %c0_76, %c0_77] : memref<2x32x96xf32, #tpu.memory_space<vmem>>, vector<1x32x96xf32>
    %164 = vector.shape_cast %163 : vector<1x32x96xf32> to vector<32x96xf32>
    %cst_78 = arith.constant dense<0.000000e+00> : vector<16x96xf32>
    %165 = tpu.matmul %162, %164, %cst_78 {dimension_numbers = #tpu.dot_dimension_numbers<[1], [0], [0], [1], [0, 0, 1, 1], [], []>} : vector<16x32xf32>, vector<32x96xf32>, vector<16x96xf32> -> vector<16x96xf32>
    %c1_79 = arith.constant 1 : index
    %c0_80 = arith.constant 0 : index
    %c0_81 = arith.constant 0 : index
    %166 = vector.load %arg5[%c1_79, %c0_80, %c0_81] : memref<2x1x96xf32, #tpu.memory_space<vmem>>, vector<1x1x96xf32>
    %167 = vector.shape_cast %166 : vector<1x1x96xf32> to vector<1x96xf32>
    %168 = vector.broadcast %167 : vector<1x96xf32> to vector<16x96xf32>
    %169 = arith.addf %165, %168 : vector<16x96xf32>
    %c1_82 = arith.constant 1 : index
    %c0_83 = arith.constant 0 : index
    %c0_84 = arith.constant 0 : index
    %170 = vector.load %arg6[%c1_82, %c0_83, %c0_84] : memref<2x32x32xf32, #tpu.memory_space<vmem>>, vector<1x32x32xf32>
    %171 = vector.shape_cast %170 : vector<1x32x32xf32> to vector<32x32xf32>
    %cst_85 = arith.constant 0.000000e+00 : f32
    %172 = vector.broadcast %cst_85 : f32 to vector<16x32xf32>
    %173 = vector.extract_strided_slice %169 {offsets = [0, 0], sizes = [16, 16], strides = [1, 1]} : vector<16x96xf32> to vector<16x16xf32>
    %174 = vector.shape_cast %173 : vector<16x16xf32> to vector<2x8x16xf32>
    %175 = vector.extract_strided_slice %169 {offsets = [0, 32], sizes = [16, 16], strides = [1, 1]} : vector<16x96xf32> to vector<16x16xf32>
    %176 = vector.shape_cast %175 : vector<16x16xf32> to vector<2x8x16xf32>
    %177 = vector.extract_strided_slice %169 {offsets = [0, 64], sizes = [16, 16], strides = [1, 1]} : vector<16x96xf32> to vector<16x16xf32>
    %178 = vector.shape_cast %177 : vector<16x16xf32> to vector<2x8x16xf32>
    "tpu.trace_start"() <{level = 10 : i32, message = "bqd,bkd->bqk"}> : () -> ()
    %cst_86 = arith.constant dense<0.000000e+00> : vector<2x8x8xf32>
    %179 = tpu.matmul %174, %176, %cst_86 {dimension_numbers = #tpu.dot_dimension_numbers<[2], [2], [1], [1], [0, 0, 0, 1, 1, 1], [0], [0]>} : vector<2x8x16xf32>, vector<2x8x16xf32>, vector<2x8x8xf32> -> vector<2x8x8xf32>
    "tpu.trace_stop"() : () -> ()
    %cst_87 = arith.constant 2.500000e-01 : f32
    %180 = vector.broadcast %cst_87 : f32 to vector<2x8x8xf32>
    %181 = arith.mulf %179, %180 : vector<2x8x8xf32>
    %182 = vector.broadcast %24 : vector<2x1x8xf32> to vector<2x8x8xf32>
    %183 = arith.addf %181, %182 : vector<2x8x8xf32>
    %cst_88 = arith.constant dense<0xFF800000> : vector<2x8xf32>
    %184 = vector.multi_reduction <maximumf>, %183, %cst_88 [2] : vector<2x8x8xf32> to vector<2x8xf32>
    %185 = vector.shape_cast %184 : vector<2x8xf32> to vector<2x8x1xf32>
    %186 = vector.broadcast %185 : vector<2x8x1xf32> to vector<2x8x8xf32>
    %187 = arith.subf %183, %186 : vector<2x8x8xf32>
    %188 = math.exp %187 : vector<2x8x8xf32>
    %cst_89 = arith.constant dense<0.000000e+00> : vector<2x8xf32>
    %189 = vector.multi_reduction <add>, %188, %cst_89 [2] : vector<2x8x8xf32> to vector<2x8xf32>
    %190 = vector.shape_cast %189 : vector<2x8xf32> to vector<2x8x1xf32>
    %191 = tpu.reciprocal %190 {approx = true} : vector<2x8x1xf32> -> vector<2x8x1xf32>
    %192 = vector.broadcast %191 : vector<2x8x1xf32> to vector<2x8x8xf32>
    %193 = arith.mulf %188, %192 : vector<2x8x8xf32>
    "tpu.trace_start"() <{level = 10 : i32, message = "bqk,bkd->bqd"}> : () -> ()
    %cst_90 = arith.constant dense<0.000000e+00> : vector<2x8x16xf32>
    %194 = tpu.matmul %193, %178, %cst_90 {dimension_numbers = #tpu.dot_dimension_numbers<[2], [1], [1], [2], [0, 0, 0, 1, 1, 2], [0], [0]>} : vector<2x8x8xf32>, vector<2x8x16xf32>, vector<2x8x16xf32> -> vector<2x8x16xf32>
    "tpu.trace_stop"() : () -> ()
    %195 = vector.shape_cast %194 : vector<2x8x16xf32> to vector<16x16xf32>
    %196 = vector.extract_strided_slice %171 {offsets = [0, 0], sizes = [16, 32], strides = [1, 1]} : vector<32x32xf32> to vector<16x32xf32>
    %cst_91 = arith.constant dense<0.000000e+00> : vector<16x32xf32>
    %197 = tpu.matmul %195, %196, %cst_91 {dimension_numbers = #tpu.dot_dimension_numbers<[1], [0], [0], [1], [0, 0, 1, 1], [], []>} : vector<16x16xf32>, vector<16x32xf32>, vector<16x32xf32> -> vector<16x32xf32>
    %198 = arith.addf %172, %197 : vector<16x32xf32>
    %199 = vector.extract_strided_slice %169 {offsets = [0, 16], sizes = [16, 16], strides = [1, 1]} : vector<16x96xf32> to vector<16x16xf32>
    %200 = vector.shape_cast %199 : vector<16x16xf32> to vector<2x8x16xf32>
    %201 = vector.extract_strided_slice %169 {offsets = [0, 48], sizes = [16, 16], strides = [1, 1]} : vector<16x96xf32> to vector<16x16xf32>
    %202 = vector.shape_cast %201 : vector<16x16xf32> to vector<2x8x16xf32>
    %203 = vector.extract_strided_slice %169 {offsets = [0, 80], sizes = [16, 16], strides = [1, 1]} : vector<16x96xf32> to vector<16x16xf32>
    %204 = vector.shape_cast %203 : vector<16x16xf32> to vector<2x8x16xf32>
    "tpu.trace_start"() <{level = 10 : i32, message = "bqd,bkd->bqk"}> : () -> ()
    %cst_92 = arith.constant dense<0.000000e+00> : vector<2x8x8xf32>
    %205 = tpu.matmul %200, %202, %cst_92 {dimension_numbers = #tpu.dot_dimension_numbers<[2], [2], [1], [1], [0, 0, 0, 1, 1, 1], [0], [0]>} : vector<2x8x16xf32>, vector<2x8x16xf32>, vector<2x8x8xf32> -> vector<2x8x8xf32>
    "tpu.trace_stop"() : () -> ()
    %cst_93 = arith.constant 2.500000e-01 : f32
    %206 = vector.broadcast %cst_93 : f32 to vector<2x8x8xf32>
    %207 = arith.mulf %205, %206 : vector<2x8x8xf32>
    %208 = vector.broadcast %24 : vector<2x1x8xf32> to vector<2x8x8xf32>
    %209 = arith.addf %207, %208 : vector<2x8x8xf32>
    %cst_94 = arith.constant dense<0xFF800000> : vector<2x8xf32>
    %210 = vector.multi_reduction <maximumf>, %209, %cst_94 [2] : vector<2x8x8xf32> to vector<2x8xf32>
    %211 = vector.shape_cast %210 : vector<2x8xf32> to vector<2x8x1xf32>
    %212 = vector.broadcast %211 : vector<2x8x1xf32> to vector<2x8x8xf32>
    %213 = arith.subf %209, %212 : vector<2x8x8xf32>
    %214 = math.exp %213 : vector<2x8x8xf32>
    %cst_95 = arith.constant dense<0.000000e+00> : vector<2x8xf32>
    %215 = vector.multi_reduction <add>, %214, %cst_95 [2] : vector<2x8x8xf32> to vector<2x8xf32>
    %216 = vector.shape_cast %215 : vector<2x8xf32> to vector<2x8x1xf32>
    %217 = tpu.reciprocal %216 {approx = true} : vector<2x8x1xf32> -> vector<2x8x1xf32>
    %218 = vector.broadcast %217 : vector<2x8x1xf32> to vector<2x8x8xf32>
    %219 = arith.mulf %214, %218 : vector<2x8x8xf32>
    "tpu.trace_start"() <{level = 10 : i32, message = "bqk,bkd->bqd"}> : () -> ()
    %cst_96 = arith.constant dense<0.000000e+00> : vector<2x8x16xf32>
    %220 = tpu.matmul %219, %204, %cst_96 {dimension_numbers = #tpu.dot_dimension_numbers<[2], [1], [1], [2], [0, 0, 0, 1, 1, 2], [0], [0]>} : vector<2x8x8xf32>, vector<2x8x16xf32>, vector<2x8x16xf32> -> vector<2x8x16xf32>
    "tpu.trace_stop"() : () -> ()
    %221 = vector.shape_cast %220 : vector<2x8x16xf32> to vector<16x16xf32>
    %222 = vector.extract_strided_slice %171 {offsets = [16, 0], sizes = [16, 32], strides = [1, 1]} : vector<32x32xf32> to vector<16x32xf32>
    %cst_97 = arith.constant dense<0.000000e+00> : vector<16x32xf32>
    %223 = tpu.matmul %221, %222, %cst_97 {dimension_numbers = #tpu.dot_dimension_numbers<[1], [0], [0], [1], [0, 0, 1, 1], [], []>} : vector<16x16xf32>, vector<16x32xf32>, vector<16x32xf32> -> vector<16x32xf32>
    %224 = arith.addf %198, %223 : vector<16x32xf32>
    %c1_98 = arith.constant 1 : index
    %c0_99 = arith.constant 0 : index
    %c0_100 = arith.constant 0 : index
    %225 = vector.load %arg7[%c1_98, %c0_99, %c0_100] : memref<2x1x32xf32, #tpu.memory_space<vmem>>, vector<1x1x32xf32>
    %226 = vector.shape_cast %225 : vector<1x1x32xf32> to vector<1x32xf32>
    %227 = vector.broadcast %226 : vector<1x32xf32> to vector<16x32xf32>
    %228 = arith.addf %224, %227 : vector<16x32xf32>
    %229 = arith.addf %228, %162 : vector<16x32xf32>
    %c1_101 = arith.constant 1 : index
    %c0_102 = arith.constant 0 : index
    %c0_103 = arith.constant 0 : index
    %230 = vector.load %arg8[%c1_101, %c0_102, %c0_103] : memref<2x1x32xf32, #tpu.memory_space<vmem>>, vector<1x1x32xf32>
    %231 = vector.shape_cast %230 : vector<1x1x32xf32> to vector<1x32xf32>
    %c1_104 = arith.constant 1 : index
    %c0_105 = arith.constant 0 : index
    %c0_106 = arith.constant 0 : index
    %232 = vector.load %arg9[%c1_104, %c0_105, %c0_106] : memref<2x1x32xf32, #tpu.memory_space<vmem>>, vector<1x1x32xf32>
    %233 = vector.shape_cast %232 : vector<1x1x32xf32> to vector<1x32xf32>
    %cst_107 = arith.constant dense<0.000000e+00> : vector<16xf32>
    %234 = vector.multi_reduction <add>, %229, %cst_107 [1] : vector<16x32xf32> to vector<16xf32>
    %235 = vector.shape_cast %234 : vector<16xf32> to vector<16x1xf32>
    %cst_108 = arith.constant 3.200000e+01 : f32
    %236 = vector.broadcast %cst_108 : f32 to vector<16x1xf32>
    %237 = arith.divf %235, %236 : vector<16x1xf32>
    %238 = vector.broadcast %237 : vector<16x1xf32> to vector<16x32xf32>
    %239 = arith.subf %229, %238 : vector<16x32xf32>
    %240 = arith.mulf %239, %239 : vector<16x32xf32>
    %cst_109 = arith.constant dense<0.000000e+00> : vector<16xf32>
    %241 = vector.multi_reduction <add>, %240, %cst_109 [1] : vector<16x32xf32> to vector<16xf32>
    %242 = vector.shape_cast %241 : vector<16xf32> to vector<16x1xf32>
    %cst_110 = arith.constant 3.200000e+01 : f32
    %243 = vector.broadcast %cst_110 : f32 to vector<16x1xf32>
    %244 = arith.divf %242, %243 : vector<16x1xf32>
    %cst_111 = arith.constant 9.99999996E-13 : f32
    %245 = vector.broadcast %cst_111 : f32 to vector<16x1xf32>
    %246 = arith.addf %244, %245 : vector<16x1xf32>
    %247 = math.rsqrt %246 : vector<16x1xf32>
    %248 = vector.broadcast %247 : vector<16x1xf32> to vector<16x32xf32>
    %249 = arith.mulf %239, %248 : vector<16x32xf32>
    %250 = vector.broadcast %231 : vector<1x32xf32> to vector<16x32xf32>
    %251 = arith.mulf %249, %250 : vector<16x32xf32>
    %252 = vector.broadcast %233 : vector<1x32xf32> to vector<16x32xf32>
    %253 = arith.addf %251, %252 : vector<16x32xf32>
    %c1_112 = arith.constant 1 : index
    %c0_113 = arith.constant 0 : index
    %c0_114 = arith.constant 0 : index
    %254 = vector.load %arg10[%c1_112, %c0_113, %c0_114] : memref<2x32x64xf32, #tpu.memory_space<vmem>>, vector<1x32x64xf32>
    %255 = vector.shape_cast %254 : vector<1x32x64xf32> to vector<32x64xf32>
    %cst_115 = arith.constant dense<0.000000e+00> : vector<16x64xf32>
    %256 = tpu.matmul %253, %255, %cst_115 {dimension_numbers = #tpu.dot_dimension_numbers<[1], [0], [0], [1], [0, 0, 1, 1], [], []>} : vector<16x32xf32>, vector<32x64xf32>, vector<16x64xf32> -> vector<16x64xf32>
    %c1_116 = arith.constant 1 : index
    %c0_117 = arith.constant 0 : index
    %c0_118 = arith.constant 0 : index
    %257 = vector.load %arg11[%c1_116, %c0_117, %c0_118] : memref<2x1x64xf32, #tpu.memory_space<vmem>>, vector<1x1x64xf32>
    %258 = vector.shape_cast %257 : vector<1x1x64xf32> to vector<1x64xf32>
    %259 = vector.broadcast %258 : vector<1x64xf32> to vector<16x64xf32>
    %260 = arith.addf %256, %259 : vector<16x64xf32>
    %cst_119 = arith.constant 5.000000e-01 : f32
    %261 = vector.broadcast %cst_119 : f32 to vector<16x64xf32>
    %262 = arith.mulf %261, %260 : vector<16x64xf32>
    %cst_120 = arith.constant 0.707106769 : f32
    %263 = vector.broadcast %cst_120 : f32 to vector<16x64xf32>
    %264 = arith.mulf %260, %263 : vector<16x64xf32>
    %265 = math.erf %264 : vector<16x64xf32>
    %cst_121 = arith.constant 1.000000e+00 : f32
    %266 = vector.broadcast %cst_121 : f32 to vector<16x64xf32>
    %267 = arith.addf %266, %265 : vector<16x64xf32>
    %268 = arith.mulf %262, %267 : vector<16x64xf32>
    %c1_122 = arith.constant 1 : index
    %c0_123 = arith.constant 0 : index
    %c0_124 = arith.constant 0 : index
    %269 = vector.load %arg12[%c1_122, %c0_123, %c0_124] : memref<2x64x32xf32, #tpu.memory_space<vmem>>, vector<1x64x32xf32>
    %270 = vector.shape_cast %269 : vector<1x64x32xf32> to vector<64x32xf32>
    %cst_125 = arith.constant dense<0.000000e+00> : vector<16x32xf32>
    %271 = tpu.matmul %268, %270, %cst_125 {dimension_numbers = #tpu.dot_dimension_numbers<[1], [0], [0], [1], [0, 0, 1, 1], [], []>} : vector<16x64xf32>, vector<64x32xf32>, vector<16x32xf32> -> vector<16x32xf32>
    %c1_126 = arith.constant 1 : index
    %c0_127 = arith.constant 0 : index
    %c0_128 = arith.constant 0 : index
    %272 = vector.load %arg13[%c1_126, %c0_127, %c0_128] : memref<2x1x32xf32, #tpu.memory_space<vmem>>, vector<1x1x32xf32>
    %273 = vector.shape_cast %272 : vector<1x1x32xf32> to vector<1x32xf32>
    %274 = vector.broadcast %273 : vector<1x32xf32> to vector<16x32xf32>
    %275 = arith.addf %271, %274 : vector<16x32xf32>
    %276 = arith.addf %275, %253 : vector<16x32xf32>
    %c1_129 = arith.constant 1 : index
    %c0_130 = arith.constant 0 : index
    %c0_131 = arith.constant 0 : index
    %277 = vector.load %arg14[%c1_129, %c0_130, %c0_131] : memref<2x1x32xf32, #tpu.memory_space<vmem>>, vector<1x1x32xf32>
    %278 = vector.shape_cast %277 : vector<1x1x32xf32> to vector<1x32xf32>
    %c1_132 = arith.constant 1 : index
    %c0_133 = arith.constant 0 : index
    %c0_134 = arith.constant 0 : index
    %279 = vector.load %arg15[%c1_132, %c0_133, %c0_134] : memref<2x1x32xf32, #tpu.memory_space<vmem>>, vector<1x1x32xf32>
    %280 = vector.shape_cast %279 : vector<1x1x32xf32> to vector<1x32xf32>
    %cst_135 = arith.constant dense<0.000000e+00> : vector<16xf32>
    %281 = vector.multi_reduction <add>, %276, %cst_135 [1] : vector<16x32xf32> to vector<16xf32>
    %282 = vector.shape_cast %281 : vector<16xf32> to vector<16x1xf32>
    %cst_136 = arith.constant 3.200000e+01 : f32
    %283 = vector.broadcast %cst_136 : f32 to vector<16x1xf32>
    %284 = arith.divf %282, %283 : vector<16x1xf32>
    %285 = vector.broadcast %284 : vector<16x1xf32> to vector<16x32xf32>
    %286 = arith.subf %276, %285 : vector<16x32xf32>
    %287 = arith.mulf %286, %286 : vector<16x32xf32>
    %cst_137 = arith.constant dense<0.000000e+00> : vector<16xf32>
    %288 = vector.multi_reduction <add>, %287, %cst_137 [1] : vector<16x32xf32> to vector<16xf32>
    %289 = vector.shape_cast %288 : vector<16xf32> to vector<16x1xf32>
    %cst_138 = arith.constant 3.200000e+01 : f32
    %290 = vector.broadcast %cst_138 : f32 to vector<16x1xf32>
    %291 = arith.divf %289, %290 : vector<16x1xf32>
    %cst_139 = arith.constant 9.99999996E-13 : f32
    %292 = vector.broadcast %cst_139 : f32 to vector<16x1xf32>
    %293 = arith.addf %291, %292 : vector<16x1xf32>
    %294 = math.rsqrt %293 : vector<16x1xf32>
    %295 = vector.broadcast %294 : vector<16x1xf32> to vector<16x32xf32>
    %296 = arith.mulf %286, %295 : vector<16x32xf32>
    %297 = vector.broadcast %278 : vector<1x32xf32> to vector<16x32xf32>
    %298 = arith.mulf %296, %297 : vector<16x32xf32>
    %299 = vector.broadcast %280 : vector<1x32xf32> to vector<16x32xf32>
    %300 = arith.addf %298, %299 : vector<16x32xf32>
    %301 = vector.shape_cast %300 : vector<16x32xf32> to vector<2x8x32xf32>
    %302 = vector.extract_strided_slice %301 {offsets = [0, 0, 0], sizes = [2, 1, 32], strides = [1, 1, 1]} : vector<2x8x32xf32> to vector<2x1x32xf32>
    %303 = vector.shape_cast %302 : vector<2x1x32xf32> to vector<2x32xf32>
    %c0_140 = arith.constant 0 : index
    %c0_141 = arith.constant 0 : index
    %304 = vector.load %arg16[%c0_140, %c0_141] : memref<32x32xf32, #tpu.memory_space<vmem>>, vector<32x32xf32>
    %cst_142 = arith.constant dense<0.000000e+00> : vector<2x32xf32>
    %305 = tpu.matmul %303, %304, %cst_142 {dimension_numbers = #tpu.dot_dimension_numbers<[1], [0], [0], [1], [0, 0, 1, 1], [], []>} : vector<2x32xf32>, vector<32x32xf32>, vector<2x32xf32> -> vector<2x32xf32>
    %c0_143 = arith.constant 0 : index
    %c0_144 = arith.constant 0 : index
    %306 = vector.load %arg17[%c0_143, %c0_144] : memref<1x32xf32, #tpu.memory_space<vmem>>, vector<1x32xf32>
    %307 = vector.broadcast %306 : vector<1x32xf32> to vector<2x32xf32>
    %308 = arith.addf %305, %307 : vector<2x32xf32>
    %309 = math.tanh %308 : vector<2x32xf32>
    %c0_145 = arith.constant 0 : index
    %c0_146 = arith.constant 0 : index
    %310 = vector.load %arg18[%c0_145, %c0_146] : memref<32x128xf32, #tpu.memory_space<vmem>>, vector<32x128xf32>
    %cst_147 = arith.constant dense<0.000000e+00> : vector<2x128xf32>
    %311 = tpu.matmul %309, %310, %cst_147 {dimension_numbers = #tpu.dot_dimension_numbers<[1], [0], [0], [1], [0, 0, 1, 1], [], []>} : vector<2x32xf32>, vector<32x128xf32>, vector<2x128xf32> -> vector<2x128xf32>
    %c0_148 = arith.constant 0 : index
    %c0_149 = arith.constant 0 : index
    %312 = vector.load %arg19[%c0_148, %c0_149] : memref<1x128xf32, #tpu.memory_space<vmem>>, vector<1x128xf32>
    %313 = vector.broadcast %312 : vector<1x128xf32> to vector<2x128xf32>
    %314 = arith.addf %311, %313 : vector<2x128xf32>
    %c0_150 = arith.constant 0 : index
    %c0_151 = arith.constant 0 : index
    %315 = vector.load %arg20[%c0_150, %c0_151] : memref<2x128xf32, #tpu.memory_space<vmem>>, vector<2x128xf32>
    tpu.vector_store %arg20[%c0_150, %c0_151], %314 {strides = array<i32>} : memref<2x128xf32, #tpu.memory_space<vmem>>, vector<2x128xf32>,
    return
  }
}

</mosaic_0001>

<llo_original>
// kernel: tpu_custom_call.1
$region0: #{tpu_custom_call.1}
  #allocation0 [shape = 'u32[]', space=smem, size = 0x4, offset = 0x4, fixed_abs, tag = 'smem constant byte address 0x4 - core index']
  #allocation1 [shape = 'u32[72,128]{1,0:T(1,128)}', space=vmem, size = 0x9000, scoped, tag = 'internal scratch']
  %s0 = inlined_call_operand.hbm [shape: f32[16,32], index: 0, kind: input, shape index: {}]
  %s1 = inlined_call_operand.hbm [shape: f32[2,8], index: 1, kind: input, shape index: {}]
  %s2 = inlined_call_operand.hbm [shape: f32[1,32], index: 2, kind: input, shape index: {}]
  %s3 = inlined_call_operand.hbm [shape: f32[1,32], index: 3, kind: input, shape index: {}]
  %s4 = inlined_call_operand.vmem [shape: f32[2,32,96], index: 4, kind: input, shape index: {}]
  %s5 = inlined_call_operand.vmem [shape: f32[2,1,96], index: 5, kind: input, shape index: {}]
  %s6 = inlined_call_operand.vmem [shape: f32[2,32,32], index: 6, kind: input, shape index: {}]
  %s7 = inlined_call_operand.vmem [shape: f32[2,1,32], index: 7, kind: input, shape index: {}]
  %s8 = inlined_call_operand.hbm [shape: f32[2,1,32], index: 8, kind: input, shape index: {}]
  %s9 = inlined_call_operand.vmem [shape: f32[2,1,32], index: 9, kind: input, shape index: {}]
  %s10 = inlined_call_operand.vmem [shape: f32[2,32,64], index: 10, kind: input, shape index: {}]
  %s11 = inlined_call_operand.vmem [shape: f32[2,1,64], index: 11, kind: input, shape index: {}]
  %s12 = inlined_call_operand.vmem [shape: f32[2,64,32], index: 12, kind: input, shape index: {}]
  %s13 = inlined_call_operand.vmem [shape: f32[2,1,32], index: 13, kind: input, shape index: {}]
  %s14 = inlined_call_operand.hbm [shape: f32[2,1,32], index: 14, kind: input, shape index: {}]
  %s15 = inlined_call_operand.vmem [shape: f32[2,1,32], index: 15, kind: input, shape index: {}]
  %s16 = inlined_call_operand.hbm [shape: f32[32,32], index: 16, kind: input, shape index: {}]
  %s17 = inlined_call_operand.vmem [shape: f32[1,32], index: 17, kind: input, shape index: {}]
  %s18 = inlined_call_operand.hbm [shape: f32[32,128], index: 18, kind: input, shape index: {}]
  %s19 = inlined_call_operand.vmem [shape: f32[1,128], index: 19, kind: input, shape index: {}]
  %s20 = inlined_call_operand.hbm [shape: f32[2,128], index: 20, kind: output, shape index: {}]
  %s21 = sld [smem:[#allocation0]]
  $region122: #{tpu_custom_call.1} parent=0
    _
  %s23 = ssub.s32 1, %s21
  %s24 = scalar_select 0, %s23, %s21
  $region1: #{tpu_custom_call.1} parent=0
    #allocation2 [shape = 'u8[8192]{0}', space=vmem, size = 0x2000, scoped, tag = 'input window, operand 0, single buffered']
    #allocation3 [shape = 's32[1]{0}', space=sflag, size = 0x4, scoped, tag = 'scoped memory for tpu_custom_call.1']
    #allocation4 [shape = 's32[1]{0}', space=sflag, size = 0x4, scoped, tag = 'scoped memory for tpu_custom_call.1']
    #allocation5 [shape = 'u8[1024]{0}', space=vmem, size = 0x400, scoped, tag = 'input window, operand 1, single buffered']
    #allocation6 [shape = 's32[1]{0}', space=sflag, size = 0x4, scoped, tag = 'scoped memory for tpu_custom_call.1']
    #allocation7 [shape = 'u8[512]{0}', space=vmem, size = 0x400, scoped, tag = 'input window, operand 2, single buffered']
    #allocation8 [shape = 'u8[512]{0}', space=vmem, size = 0x400, scoped, tag = 'input window, operand 3, single buffered']
    #allocation9 [shape = 's32[1]{0}', space=sflag, size = 0x4, scoped, tag = 'scoped memory for tpu_custom_call.1']
    #allocation10 [shape = 'u8[1024]{0}', space=vmem, size = 0x400, scoped, tag = 'input window, operand 8, single buffered']
    #allocation11 [shape = 'u8[1024]{0}', space=vmem, size = 0x400, scoped, tag = 'input window, operand 14, single buffered']
    #allocation12 [shape = 's32[1]{0}', space=sflag, size = 0x4, scoped, tag = 'scoped memory for tpu_custom_call.1']
    #allocation13 [shape = 'u8[16384]{0}', space=vmem, size = 0x4000, scoped, tag = 'input window, operand 16, single buffered']
    #allocation14 [shape = 'u8[16384]{0}', space=vmem, size = 0x4000, scoped, tag = 'input window, operand 18, single buffered']
    #allocation15 [shape = 's32[1]{0}', space=sflag, size = 0x4, scoped, tag = 'scoped memory for tpu_custom_call.1']
    #allocation16 [shape = 'u8[1024]{0}', space=vmem, size = 0x400, scoped, tag = 'output window, operand 0, single buffered']
    %25 = vsyncpa [#allocation3], 0
    %26 = vsyncpa [#allocation6], 0
    %27 = vsyncpa [#allocation9], 0
    %28 = vsyncpa [#allocation12], 0
    %29 = vsyncpa [#allocation15], 0
    %30 = vsyncpa [#allocation4], 0
    // Predicated region
    $region2: #{tpu_custom_call.1} parent=1 // pred_check
      _
    $region3: #{tpu_custom_call.1} parent=1 // pred_check_branch
      %32 = sbr.rel (0) target = $region5
    $region4: #{tpu_custom_call.1} parent=1 // pred_region
      %34 = vsyncadd [#allocation3], 0
      %s35 = sshll.u32 %s0, 4
      %s36 = int_to_ptr.hbm [resolvable:$true] %s35
      %s37 = sshll.u32 [#allocation2], 4
      %s38 = int_to_ptr.vmem [resolvable:$true] %s37
      %43 = dma.hbm_to_vmem [thread:$0]  %s36, 256, %s38, [#allocation3], 128, 128, 8
    $region5: #{tpu_custom_call.1} parent=1 // pred_fallthru
      _
    // Predicated region
    $region6: #{tpu_custom_call.1} parent=1 // pred_check
      _
    $region7: #{tpu_custom_call.1} parent=1 // pred_check_branch
      %45 = sbr.rel (0) target = $region9
    $region8: #{tpu_custom_call.1} parent=1 // pred_region
      %47 = vsyncadd [#allocation6], 0
      %s49 = sshll.u32 %s1, 4
      %s50 = int_to_ptr.hbm [resolvable:$true] %s49
      %s51 = sshll.u32 [#allocation5], 4
      %s52 = int_to_ptr.vmem [resolvable:$true] %s51
      %54 = dma.hbm_to_vmem [thread:$0]  %s50, 32, %s52, [#allocation6]
    $region9: #{tpu_custom_call.1} parent=1 // pred_fallthru
      _
    // Predicated region
    $region10: #{tpu_custom_call.1} parent=1 // pred_check
      _
    $region11: #{tpu_custom_call.1} parent=1 // pred_check_branch
      %56 = sbr.rel (0) target = $region13
    $region12: #{tpu_custom_call.1} parent=1 // pred_region
      %58 = vsyncadd [#allocation6], 0
      %s60 = sshll.u32 %s2, 4
      %s61 = int_to_ptr.hbm [resolvable:$true] %s60
      %s62 = sshll.u32 [#allocation7], 4
      %s63 = int_to_ptr.vmem [resolvable:$true] %s62
      %65 = dma.hbm_to_vmem [thread:$0]  %s61, 16, %s63, [#allocation6]
    $region13: #{tpu_custom_call.1} parent=1 // pred_fallthru
      _
    // Predicated region
    $region14: #{tpu_custom_call.1} parent=1 // pred_check
      _
    $region15: #{tpu_custom_call.1} parent=1 // pred_check_branch
      %67 = sbr.rel (0) target = $region17
    $region16: #{tpu_custom_call.1} parent=1 // pred_region
      %69 = vsyncadd [#allocation9], 0
      %s71 = sshll.u32 %s3, 4
      %s72 = int_to_ptr.hbm [resolvable:$true] %s71
      %s73 = sshll.u32 [#allocation8], 4
      %s74 = int_to_ptr.vmem [resolvable:$true] %s73
      %76 = dma.hbm_to_vmem [thread:$0]  %s72, 16, %s74, [#allocation9]
    $region17: #{tpu_custom_call.1} parent=1 // pred_fallthru
      _
    // Predicated region
    $region18: #{tpu_custom_call.1} parent=1 // pred_check
      _
    $region19: #{tpu_custom_call.1} parent=1 // pred_check_branch
      %78 = sbr.rel (0) target = $region21
    $region20: #{tpu_custom_call.1} parent=1 // pred_region
      _
    $region21: #{tpu_custom_call.1} parent=1 // pred_fallthru
      _
    // Predicated region
    $region22: #{tpu_custom_call.1} parent=1 // pred_check
      _
    $region23: #{tpu_custom_call.1} parent=1 // pred_check_branch
      %80 = sbr.rel (0) target = $region25
    $region24: #{tpu_custom_call.1} parent=1 // pred_region
      _
    $region25: #{tpu_custom_call.1} parent=1 // pred_fallthru
      _
    // Predicated region
    $region26: #{tpu_custom_call.1} parent=1 // pred_check
      _
    $region27: #{tpu_custom_call.1} parent=1 // pred_check_branch
      %82 = sbr.rel (0) target = $region29
    $region28: #{tpu_custom_call.1} parent=1 // pred_region
      _
    $region29: #{tpu_custom_call.1} parent=1 // pred_fallthru
      _
    // Predicated region
    $region30: #{tpu_custom_call.1} parent=1 // pred_check
      _
    $region31: #{tpu_custom_call.1} parent=1 // pred_check_branch
      %84 = sbr.rel (0) target = $region33
    $region32: #{tpu_custom_call.1} parent=1 // pred_region
      _
    $region33: #{tpu_custom_call.1} parent=1 // pred_fallthru
      _
    // Predicated region
    $region34: #{tpu_custom_call.1} parent=1 // pred_check
      _
    $region35: #{tpu_custom_call.1} parent=1 // pred_check_branch
      %86 = sbr.rel (0) target = $region37
    $region36: #{tpu_custom_call.1} parent=1 // pred_region
      %88 = vsyncadd [#allocation9], 0
      %s89 = sshll.u32 %s8, 4
      %s90 = int_to_ptr.hbm [resolvable:$true] %s89
      %s91 = sshll.u32 [#allocation10], 4
      %s92 = int_to_ptr.vmem [resolvable:$true] %s91
      %97 = dma.hbm_to_vmem [thread:$0]  %s90, 32, %s92, [#allocation9], 16, 16, 1
    $region37: #{tpu_custom_call.1} parent=1 // pred_fallthru
      _
    // Predicated region
    $region38: #{tpu_custom_call.1} parent=1 // pred_check
      _
    $region39: #{tpu_custom_call.1} parent=1 // pred_check_branch
      %99 = sbr.rel (0) target = $region41
    $region40: #{tpu_custom_call.1} parent=1 // pred_region
      _
    $region41: #{tpu_custom_call.1} parent=1 // pred_fallthru
      _
    // Predicated region
    $region42: #{tpu_custom_call.1} parent=1 // pred_check
      _
    $region43: #{tpu_custom_call.1} parent=1 // pred_check_branch
      %101 = sbr.rel (0) target = $region45
    $region44: #{tpu_custom_call.1} parent=1 // pred_region
      _
    $region45: #{tpu_custom_call.1} parent=1 // pred_fallthru
      _
    // Predicated region
    $region46: #{tpu_custom_call.1} parent=1 // pred_check
      _
    $region47: #{tpu_custom_call.1} parent=1 // pred_check_branch
      %103 = sbr.rel (0) target = $region49
    $region48: #{tpu_custom_call.1} parent=1 // pred_region
      _
    $region49: #{tpu_custom_call.1} parent=1 // pred_fallthru
      _
    // Predicated region
    $region50: #{tpu_custom_call.1} parent=1 // pred_check
      _
    $region51: #{tpu_custom_call.1} parent=1 // pred_check_branch
      %105 = sbr.rel (0) target = $region53
    $region52: #{tpu_custom_call.1} parent=1 // pred_region
      _
    $region53: #{tpu_custom_call.1} parent=1 // pred_fallthru
      _
    // Predicated region
    $region54: #{tpu_custom_call.1} parent=1 // pred_check
      _
    $region55: #{tpu_custom_call.1} parent=1 // pred_check_branch
      %107 = sbr.rel (0) target = $region57
    $region56: #{tpu_custom_call.1} parent=1 // pred_region
      _
    $region57: #{tpu_custom_call.1} parent=1 // pred_fallthru
      _
    // Predicated region
    $region58: #{tpu_custom_call.1} parent=1 // pred_check
      _
    $region59: #{tpu_custom_call.1} parent=1 // pred_check_branch
      %109 = sbr.rel (0) target = $region61
    $region60: #{tpu_custom_call.1} parent=1 // pred_region
      %111 = vsyncadd [#allocation12], 0
      %s112 = sshll.u32 %s14, 4
      %s113 = int_to_ptr.hbm [resolvable:$true] %s112
      %s114 = sshll.u32 [#allocation11], 4
      %s115 = int_to_ptr.vmem [resolvable:$true] %s114
      %120 = dma.hbm_to_vmem [thread:$0]  %s113, 32, %s115, [#allocation12], 16, 16, 1
    $region61: #{tpu_custom_call.1} parent=1 // pred_fallthru
      _
    // Predicated region
    $region62: #{tpu_custom_call.1} parent=1 // pred_check
      _
    $region63: #{tpu_custom_call.1} parent=1 // pred_check_branch
      %122 = sbr.rel (0) target = $region65
    $region64: #{tpu_custom_call.1} parent=1 // pred_region
      _
    $region65: #{tpu_custom_call.1} parent=1 // pred_fallthru
      _
    // Predicated region
    $region66: #{tpu_custom_call.1} parent=1 // pred_check
      _
    $region67: #{tpu_custom_call.1} parent=1 // pred_check_branch
      %124 = sbr.rel (0) target = $region69
    $region68: #{tpu_custom_call.1} parent=1 // pred_region
      %126 = vsyncadd [#allocation12], 0
      %s127 = sshll.u32 %s16, 4
      %s128 = int_to_ptr.hbm [resolvable:$true] %s127
      %s129 = sshll.u32 [#allocation13], 4
      %s130 = int_to_ptr.vmem [resolvable:$true] %s129
      %135 = dma.hbm_to_vmem [thread:$0]  %s128, 512, %s130, [#allocation12], 128, 128, 8
    $region69: #{tpu_custom_call.1} parent=1 // pred_fallthru
      _
    // Predicated region
    $region70: #{tpu_custom_call.1} parent=1 // pred_check
      _
    $region71: #{tpu_custom_call.1} parent=1 // pred_check_branch
      %137 = sbr.rel (0) target = $region73
    $region72: #{tpu_custom_call.1} parent=1 // pred_region
      _
    $region73: #{tpu_custom_call.1} parent=1 // pred_fallthru
      _
    // Predicated region
    $region74: #{tpu_custom_call.1} parent=1 // pred_check
      _
    $region75: #{tpu_custom_call.1} parent=1 // pred_check_branch
      %139 = sbr.rel (0) target = $region77
    $region76: #{tpu_custom_call.1} parent=1 // pred_region
      %141 = vsyncadd [#allocation15], 0
      %s142 = sshll.u32 %s18, 4
      %s143 = int_to_ptr.hbm [resolvable:$true] %s142
      %s144 = sshll.u32 [#allocation14], 4
      %s145 = int_to_ptr.vmem [resolvable:$true] %s144
      %150 = dma.hbm_to_vmem [thread:$0]  %s143, 512, %s145, [#allocation15], 128, 128, 8
    $region77: #{tpu_custom_call.1} parent=1 // pred_fallthru
      _
    // Predicated region
    $region78: #{tpu_custom_call.1} parent=1 // pred_check
      _
    $region79: #{tpu_custom_call.1} parent=1 // pred_check_branch
      %152 = sbr.rel (0) target = $region81
    $region80: #{tpu_custom_call.1} parent=1 // pred_region
      _
    $region81: #{tpu_custom_call.1} parent=1 // pred_fallthru
      _
    // Predicated region
    $region82: #{tpu_custom_call.1} parent=1 // pred_check
      _
    $region83: #{tpu_custom_call.1} parent=1 // pred_check_branch
      %154 = sbr.rel (0) target = $region85
    $region84: #{tpu_custom_call.1} parent=1 // pred_region
      %156 = dma.done [#allocation3], 256
    $region85: #{tpu_custom_call.1} parent=1 // pred_fallthru
      _
    // Predicated region
    $region86: #{tpu_custom_call.1} parent=1 // pred_check
      _
    $region87: #{tpu_custom_call.1} parent=1 // pred_check_branch
      %158 = sbr.rel (0) target = $region89
    $region88: #{tpu_custom_call.1} parent=1 // pred_region
      %160 = dma.done [#allocation6], 32
    $region89: #{tpu_custom_call.1} parent=1 // pred_fallthru
      _
    // Predicated region
    $region90: #{tpu_custom_call.1} parent=1 // pred_check
      _
    $region91: #{tpu_custom_call.1} parent=1 // pred_check_branch
      %162 = sbr.rel (0) target = $region93
    $region92: #{tpu_custom_call.1} parent=1 // pred_region
      %164 = dma.done [#allocation6], 16
    $region93: #{tpu_custom_call.1} parent=1 // pred_fallthru
      _
    // Predicated region
    $region94: #{tpu_custom_call.1} parent=1 // pred_check
      _
    $region95: #{tpu_custom_call.1} parent=1 // pred_check_branch
      %166 = sbr.rel (0) target = $region97
    $region96: #{tpu_custom_call.1} parent=1 // pred_region
      %168 = dma.done [#allocation9], 16
    $region97: #{tpu_custom_call.1} parent=1 // pred_fallthru
      _
    // Predicated region
    $region98: #{tpu_custom_call.1} parent=1 // pred_check
      _
    $region99: #{tpu_custom_call.1} parent=1 // pred_check_branch
      %170 = sbr.rel (0) target = $region101
    $region100: #{tpu_custom_call.1} parent=1 // pred_region
      %172 = dma.done [#allocation9], 32
    $region101: #{tpu_custom_call.1} parent=1 // pred_fallthru
      _
    // Predicated region
    $region102: #{tpu_custom_call.1} parent=1 // pred_check
      _
    $region103: #{tpu_custom_call.1} parent=1 // pred_check_branch
      %174 = sbr.rel (0) target = $region105
    $region104: #{tpu_custom_call.1} parent=1 // pred_region
      %176 = dma.done [#allocation12], 32
    $region105: #{tpu_custom_call.1} parent=1 // pred_fallthru
      _
    // Predicated region
    $region106: #{tpu_custom_call.1} parent=1 // pred_check
      _
    $region107: #{tpu_custom_call.1} parent=1 // pred_check_branch
      %178 = sbr.rel (0) target = $region109
    $region108: #{tpu_custom_call.1} parent=1 // pred_region
      %180 = dma.done [#allocation12], 512
    $region109: #{tpu_custom_call.1} parent=1 // pred_fallthru
      _
    // Predicated region
    $region110: #{tpu_custom_call.1} parent=1 // pred_check
      _
    $region111: #{tpu_custom_call.1} parent=1 // pred_check_branch
      %182 = sbr.rel (0) target = $region113
    $region112: #{tpu_custom_call.1} parent=1 // pred_region
      %184 = dma.done [#allocation15], 512
    $region113: #{tpu_custom_call.1} parent=1 // pred_fallthru
      _
    %v185 = vld [vmem:[#allocation2] sm:$0xff]
    %v186 = vld [vmem:[#allocation2 + $0x8] sm:$0xff]
    %v187 = vld [vmem:[#allocation7] sm:$0x1]
    %v188 = vld [vmem:[#allocation8] sm:$0x1]
    %vm189 = vcmask 261120
    %v190 = vsel %vm189, %v185, 0.0
    %191 = vadd.xlane.f32.xlu0 %v190
    %v192 = vpop.xlane.xlu0 %191
    %v193 = vsel %vm189, %v186, 0.0
    %194 = vadd.xlane.f32.xlu0 %v193
    %v195 = vpop.xlane.xlu0 %194
    %v196 = vrcp.pop 32.0
    %v197 = vmul.f32 32.0, %v196
    %v198 = vsub.f32 1.0, %v197
    %v199 = vmul.f32 %v196, %v198
    %v200 = vadd.f32 %v196, %v199
    %vm201 = vweird.f32 %v196
    %v202 = vsel %vm201, %v196, %v200
    %v203 = vmul.f32 %v192, %v202
    %v204 = vmul.f32 %v195, %v202
    %v205 = vsub.f32 %v185, %v203
    %v206 = vsub.f32 %v186, %v204
    %v207 = vmul.f32 %v205, %v205
    %v208 = vmul.f32 %v206, %v206
    %v209 = vsel %vm189, %v207, 0.0
    %210 = vadd.xlane.f32.xlu0 %v209
    %v211 = vpop.xlane.xlu0 %210
    %v212 = vsel %vm189, %v208, 0.0
    %213 = vadd.xlane.f32.xlu0 %v212
    %v214 = vpop.xlane.xlu0 %213
    %v215 = vmul.f32 %v211, %v202
    %v216 = vmul.f32 %v214, %v202
    %v217 = vadd.f32 %v215, 1e-12
    %v218 = vadd.f32 %v216, 1e-12
    %v219 = vrsqrt.pop %v217
    %v220 = vmul.f32 %v219, %v217
    %v221 = vmul.f32 %v220, %v219
    %v222 = vmul.f32 0.5, %v221
    %v223 = vsub.f32 1.5, %v222
    %v224 = vmul.f32 %v219, %v223
    %vm225 = vweird.f32 %v217
    %vm226 = vweird.f32 %v219
    %vm227 = vmor %vm225, %vm226
    %v228 = vsel %vm227, %v219, %v224
    %v229 = vrsqrt.pop %v218
    %v230 = vmul.f32 %v229, %v218
    %v231 = vmul.f32 %v230, %v229
    %v232 = vmul.f32 0.5, %v231
    %v233 = vsub.f32 1.5, %v232
    %v234 = vmul.f32 %v229, %v233
    %vm235 = vweird.f32 %v218
    %vm236 = vweird.f32 %v229
    %vm237 = vmor %vm235, %vm236
    %v238 = vsel %vm237, %v229, %v234
    %v239 = vmul.f32 %v205, %v228
    %v240 = vmul.f32 %v206, %v238
    %v242 = vperm.slane %v187, 0
    %v244 = vmul.f32 %v239, %v242
    %v245 = vmul.f32 %v240, %v242
    %v247 = vperm.slane %v188, 0
    %v249 = vadd.f32 %v244, %v247
    %v250 = vadd.f32 %v245, %v247
    %v251 = vld [vmem:[#allocation5] sm:$0x3]
    %v253 = vrot.slane %v251, 1
    %v254 = vld [vmem:[%s4] sm:$0xff]
    %v255 = vld [vmem:[%s4 + $0x8] sm:$0xff]
    %v256 = vld [vmem:[%s4 + $0x10] sm:$0xff]
    %v257 = vld [vmem:[%s4 + $0x18] sm:$0xff]
    %v258 = vld [vmem:[%s5] sm:$0x1]
    %v260 = vperm.slane %v258, 0
    %v263 = vsel %vm189, %v249, 0
    %v266 = vsel %vm189, %v250, 0
    %268 = vmatpush.msra.mxu0 0.0
    %269 = vmatpush.msra.mxu0 0.0
    %270 = vmatpush.msra.mxu0 0.0
    %271 = vmatpush.msra.mxu0 0.0
    %272 = vmatpush.msra.mxu0 0.0
    %273 = vmatpush.msra.mxu0 0.0
    %274 = vmatpush.msra.mxu0 0.0
    %275 = vmatpush.msra.mxu0 0.0
    %276 = vmatpush.msra.mxu0 0.0
    %277 = vmatpush.msra.mxu0 0.0
    %278 = vmatpush.msra.mxu0 0.0
    %279 = vmatpush.msra.mxu0 0.0
    %280 = vmatpush.msra.mxu0 %v257
    %281 = vmatpush.msra.mxu0 %v256
    %282 = vmatpush.msra.mxu0 %v255
    %283 = vmatpush.msra.mxu0 %v254
    %284 = vmatmul.f32.gmra.mxu0 %v263
    %v285 = vpop.f32.mrf.mxu0
    %v286 = vadd.f32 %v260, %v285
    %287 = vmatmul.f32.gmra.mxu0 %v266
    %v288 = vpop.f32.mrf.mxu0
    %v289 = vadd.f32 %v260, %v288
    %290 = vdwg.mxu0
    %v291 = vld [vmem:[%s6] sm:$0xff]
    %v292 = vld [vmem:[%s6 + $0x8] sm:$0xff]
    %v293 = vld [vmem:[%s6 + $0x10] sm:$0xff]
    %v294 = vld [vmem:[%s6 + $0x18] sm:$0xff]
    %296 = vrot.lane.b32.xlu0 %v286, 96
    %v297 = vpop.permute.xlu0 %296
    %vm298 = vcmask 130048
    %v299 = vsel %vm298, %v286, 0
    %v301 = vsel %vm298, %v297, 0
    %303 = vmatpush.xpose.msra.mxu0 0.0
    %304 = vmatpush.xpose.msra.mxu0 0.0
    %305 = vmatpush.xpose.msra.mxu0 0.0
    %306 = vmatpush.xpose.msra.mxu0 0.0
    %307 = vmatpush.xpose.msra.mxu0 0.0
    %308 = vmatpush.xpose.msra.mxu0 0.0
    %309 = vmatpush.xpose.msra.mxu0 0.0
    %310 = vmatpush.xpose.msra.mxu0 0.0
    %311 = vmatpush.xpose.msra.mxu0 0.0
    %312 = vmatpush.xpose.msra.mxu0 0.0
    %313 = vmatpush.xpose.msra.mxu0 0.0
    %314 = vmatpush.xpose.msra.mxu0 0.0
    %315 = vmatpush.xpose.msra.mxu0 0.0
    %316 = vmatpush.xpose.msra.mxu0 0.0
    %317 = vmatpush.xpose.msra.mxu0 0.0
    %318 = vmatpush.xpose.msra.mxu0 %v301
    %319 = vmatmul.f32.gmra.mxu0 %v299
    %v320 = vpop.f32.mrf.mxu0
    %v321 = vadd.f32 0.0, %v320
    %322 = vdwg.mxu0
    %324 = vrot.lane.b32.xlu0 %v289, 96
    %v325 = vpop.permute.xlu0 %324
    %v326 = vsel %vm298, %v289, 0
    %v328 = vsel %vm298, %v325, 0
    %330 = vmatpush.xpose.msra.mxu0 0.0
    %331 = vmatpush.xpose.msra.mxu0 0.0
    %332 = vmatpush.xpose.msra.mxu0 0.0
    %333 = vmatpush.xpose.msra.mxu0 0.0
    %334 = vmatpush.xpose.msra.mxu0 0.0
    %335 = vmatpush.xpose.msra.mxu0 0.0
    %336 = vmatpush.xpose.msra.mxu0 0.0
    %337 = vmatpush.xpose.msra.mxu0 0.0
    %338 = vmatpush.xpose.msra.mxu0 0.0
    %339 = vmatpush.xpose.msra.mxu0 0.0
    %340 = vmatpush.xpose.msra.mxu0 0.0
    %341 = vmatpush.xpose.msra.mxu0 0.0
    %342 = vmatpush.xpose.msra.mxu0 0.0
    %343 = vmatpush.xpose.msra.mxu0 0.0
    %344 = vmatpush.xpose.msra.mxu0 0.0
    %345 = vmatpush.xpose.msra.mxu0 %v328
    %346 = vmatmul.f32.gmra.mxu0 %v326
    %v347 = vpop.f32.mrf.mxu0
    %v348 = vadd.f32 0.0, %v347
    %349 = vdwg.mxu0
    %v350 = vmul.f32 %v321, 0.25
    %v351 = vmul.f32 %v348, 0.25
    %v352 = vperm.slane %v251, 0
    %v353 = vperm.slane %v253, 0
    %v356 = vadd.f32 %v350, %v352
    %v357 = vadd.f32 %v351, %v353
    %vm358 = vcmask 64512
    %v359 = vsel %vm358, %v356, -inf
    %360 = vmax.xlane.f32.xlu0 %v359
    %v361 = vpop.xlane.xlu0 %360
    %v362 = vsel %vm358, %v357, -inf
    %363 = vmax.xlane.f32.xlu0 %v362
    %v364 = vpop.xlane.xlu0 %363
    %v365 = vsub.f32 %v356, %v361
    %v366 = vsub.f32 %v357, %v364
    %v367 = vmul.f32 %v365, 1.442695
    %v368 = vpow.pop %v367
    %v369 = vmul.f32 %v366, 1.442695
    %v370 = vpow.pop %v369
    %v371 = vsel %vm358, %v368, 0.0
    %372 = vadd.xlane.f32.xlu0 %v371
    %v373 = vpop.xlane.xlu0 %372
    %v374 = vsel %vm358, %v370, 0.0
    %375 = vadd.xlane.f32.xlu0 %v374
    %v376 = vpop.xlane.xlu0 %375
    %v377 = vrcp.pop %v373
    %v378 = vrcp.pop %v376
    %v379 = vmul.f32 %v368, %v377
    %v380 = vmul.f32 %v370, %v378
    %381 = vrot.lane.b32.xlu0 %v286, 64
    %v382 = vpop.permute.xlu0 %381
    %v385 = vsel %vm358, %v379, 0
    %387 = vmatpush.msra.mxu0 0.0
    %388 = vmatpush.msra.mxu0 0.0
    %389 = vmatpush.msra.mxu0 0.0
    %390 = vmatpush.msra.mxu0 0.0
    %391 = vmatpush.msra.mxu0 0.0
    %392 = vmatpush.msra.mxu0 0.0
    %393 = vmatpush.msra.mxu0 0.0
    %394 = vmatpush.msra.mxu0 0.0
    %395 = vmatpush.msra.mxu0 0.0
    %396 = vmatpush.msra.mxu0 0.0
    %397 = vmatpush.msra.mxu0 0.0
    %398 = vmatpush.msra.mxu0 0.0
    %399 = vmatpush.msra.mxu0 0.0
    %400 = vmatpush.msra.mxu0 0.0
    %401 = vmatpush.msra.mxu0 0.0
    %402 = vmatpush.msra.mxu0 %v382
    %403 = vmatmul.f32.gmra.mxu0 %v385
    %v404 = vpop.f32.mrf.mxu0
    %v405 = vadd.f32 0.0, %v404
    %406 = vdwg.mxu0
    %407 = vrot.lane.b32.xlu0 %v289, 64
    %v408 = vpop.permute.xlu0 %407
    %v411 = vsel %vm358, %v380, 0
    %413 = vmatpush.msra.mxu0 0.0
    %414 = vmatpush.msra.mxu0 0.0
    %415 = vmatpush.msra.mxu0 0.0
    %416 = vmatpush.msra.mxu0 0.0
    %417 = vmatpush.msra.mxu0 0.0
    %418 = vmatpush.msra.mxu0 0.0
    %419 = vmatpush.msra.mxu0 0.0
    %420 = vmatpush.msra.mxu0 0.0
    %421 = vmatpush.msra.mxu0 0.0
    %422 = vmatpush.msra.mxu0 0.0
    %423 = vmatpush.msra.mxu0 0.0
    %424 = vmatpush.msra.mxu0 0.0
    %425 = vmatpush.msra.mxu0 0.0
    %426 = vmatpush.msra.mxu0 0.0
    %427 = vmatpush.msra.mxu0 0.0
    %428 = vmatpush.msra.mxu0 %v408
    %429 = vmatmul.f32.gmra.mxu0 %v411
    %v430 = vpop.f32.mrf.mxu0
    %v431 = vadd.f32 0.0, %v430
    %432 = vdwg.mxu0
    %433 = vrot.lane.b32.xlu0 %v286, 112
    %v434 = vpop.permute.xlu0 %433
    %435 = vrot.lane.b32.xlu0 %v286, 80
    %v436 = vpop.permute.xlu0 %435
    %v437 = vsel %vm298, %v434, 0
    %v439 = vsel %vm298, %v436, 0
    %441 = vmatpush.xpose.msra.mxu0 0.0
    %442 = vmatpush.xpose.msra.mxu0 0.0
    %443 = vmatpush.xpose.msra.mxu0 0.0
    %444 = vmatpush.xpose.msra.mxu0 0.0
    %445 = vmatpush.xpose.msra.mxu0 0.0
    %446 = vmatpush.xpose.msra.mxu0 0.0
    %447 = vmatpush.xpose.msra.mxu0 0.0
    %448 = vmatpush.xpose.msra.mxu0 0.0
    %449 = vmatpush.xpose.msra.mxu0 0.0
    %450 = vmatpush.xpose.msra.mxu0 0.0
    %451 = vmatpush.xpose.msra.mxu0 0.0
    %452 = vmatpush.xpose.msra.mxu0 0.0
    %453 = vmatpush.xpose.msra.mxu0 0.0
    %454 = vmatpush.xpose.msra.mxu0 0.0
    %455 = vmatpush.xpose.msra.mxu0 0.0
    %456 = vmatpush.xpose.msra.mxu0 %v439
    %457 = vmatmul.f32.gmra.mxu0 %v437
    %v458 = vpop.f32.mrf.mxu0
    %v459 = vadd.f32 0.0, %v458
    %460 = vdwg.mxu0
    %461 = vrot.lane.b32.xlu0 %v289, 112
    %v462 = vpop.permute.xlu0 %461
    %463 = vrot.lane.b32.xlu0 %v289, 80
    %v464 = vpop.permute.xlu0 %463
    %v465 = vsel %vm298, %v462, 0
    %v467 = vsel %vm298, %v464, 0
    %469 = vmatpush.xpose.msra.mxu0 0.0
    %470 = vmatpush.xpose.msra.mxu0 0.0
    %471 = vmatpush.xpose.msra.mxu0 0.0
    %472 = vmatpush.xpose.msra.mxu0 0.0
    %473 = vmatpush.xpose.msra.mxu0 0.0
    %474 = vmatpush.xpose.msra.mxu0 0.0
    %475 = vmatpush.xpose.msra.mxu0 0.0
    %476 = vmatpush.xpose.msra.mxu0 0.0
    %477 = vmatpush.xpose.msra.mxu0 0.0
    %478 = vmatpush.xpose.msra.mxu0 0.0
    %479 = vmatpush.xpose.msra.mxu0 0.0
    %480 = vmatpush.xpose.msra.mxu0 0.0
    %481 = vmatpush.xpose.msra.mxu0 0.0
    %482 = vmatpush.xpose.msra.mxu0 0.0
    %483 = vmatpush.xpose.msra.mxu0 0.0
    %484 = vmatpush.xpose.msra.mxu0 %v467
    %485 = vmatmul.f32.gmra.mxu0 %v465
    %v486 = vpop.f32.mrf.mxu0
    %v487 = vadd.f32 0.0, %v486
    %488 = vdwg.mxu0
    %v489 = vmul.f32 %v459, 0.25
    %v490 = vmul.f32 %v487, 0.25
    %v491 = vadd.f32 %v489, %v352
    %v492 = vadd.f32 %v490, %v353
    %v493 = vsel %vm358, %v491, -inf
    %494 = vmax.xlane.f32.xlu0 %v493
    %v495 = vpop.xlane.xlu0 %494
    %v496 = vsel %vm358, %v492, -inf
    %497 = vmax.xlane.f32.xlu0 %v496
    %v498 = vpop.xlane.xlu0 %497
    %v499 = vsub.f32 %v491, %v495
    %v500 = vsub.f32 %v492, %v498
    %v501 = vmul.f32 %v499, 1.442695
    %v502 = vpow.pop %v501
    %v503 = vmul.f32 %v500, 1.442695
    %v504 = vpow.pop %v503
    %v505 = vsel %vm358, %v502, 0.0
    %506 = vadd.xlane.f32.xlu0 %v505
    %v507 = vpop.xlane.xlu0 %506
    %v508 = vsel %vm358, %v504, 0.0
    %509 = vadd.xlane.f32.xlu0 %v508
    %v510 = vpop.xlane.xlu0 %509
    %v511 = vrcp.pop %v507
    %v512 = vrcp.pop %v510
    %v513 = vmul.f32 %v502, %v511
    %v514 = vmul.f32 %v504, %v512
    %515 = vrot.lane.b32.xlu0 %v286, 48
    %v516 = vpop.permute.xlu0 %515
    %v519 = vsel %vm358, %v513, 0
    %521 = vmatpush.msra.mxu0 0.0
    %522 = vmatpush.msra.mxu0 0.0
    %523 = vmatpush.msra.mxu0 0.0
    %524 = vmatpush.msra.mxu0 0.0
    %525 = vmatpush.msra.mxu0 0.0
    %526 = vmatpush.msra.mxu0 0.0
    %527 = vmatpush.msra.mxu0 0.0
    %528 = vmatpush.msra.mxu0 0.0
    %529 = vmatpush.msra.mxu0 0.0
    %530 = vmatpush.msra.mxu0 0.0
    %531 = vmatpush.msra.mxu0 0.0
    %532 = vmatpush.msra.mxu0 0.0
    %533 = vmatpush.msra.mxu0 0.0
    %534 = vmatpush.msra.mxu0 0.0
    %535 = vmatpush.msra.mxu0 0.0
    %536 = vmatpush.msra.mxu0 %v516
    %537 = vmatmul.f32.gmra.mxu0 %v519
    %v538 = vpop.f32.mrf.mxu0
    %v539 = vadd.f32 0.0, %v538
    %540 = vdwg.mxu0
    %541 = vrot.lane.b32.xlu0 %v289, 48
    %v542 = vpop.permute.xlu0 %541
    %v545 = vsel %vm358, %v514, 0
    %547 = vmatpush.msra.mxu0 0.0
    %548 = vmatpush.msra.mxu0 0.0
    %549 = vmatpush.msra.mxu0 0.0
    %550 = vmatpush.msra.mxu0 0.0
    %551 = vmatpush.msra.mxu0 0.0
    %552 = vmatpush.msra.mxu0 0.0
    %553 = vmatpush.msra.mxu0 0.0
    %554 = vmatpush.msra.mxu0 0.0
    %555 = vmatpush.msra.mxu0 0.0
    %556 = vmatpush.msra.mxu0 0.0
    %557 = vmatpush.msra.mxu0 0.0
    %558 = vmatpush.msra.mxu0 0.0
    %559 = vmatpush.msra.mxu0 0.0
    %560 = vmatpush.msra.mxu0 0.0
    %561 = vmatpush.msra.mxu0 0.0
    %562 = vmatpush.msra.mxu0 %v542
    %563 = vmatmul.f32.gmra.mxu0 %v545
    %v564 = vpop.f32.mrf.mxu0
    %v565 = vadd.f32 0.0, %v564
    %566 = vdwg.mxu0
    %v568 = vsel %vm298, %v539, 0
    %v571 = vsel %vm298, %v565, 0
    %573 = vmatpush.msra.mxu0 0.0
    %574 = vmatpush.msra.mxu0 0.0
    %575 = vmatpush.msra.mxu0 0.0
    %576 = vmatpush.msra.mxu0 0.0
    %577 = vmatpush.msra.mxu0 0.0
    %578 = vmatpush.msra.mxu0 0.0
    %579 = vmatpush.msra.mxu0 0.0
    %580 = vmatpush.msra.mxu0 0.0
    %581 = vmatpush.msra.mxu0 0.0
    %582 = vmatpush.msra.mxu0 0.0
    %583 = vmatpush.msra.mxu0 0.0
    %584 = vmatpush.msra.mxu0 0.0
    %585 = vmatpush.msra.mxu0 0.0
    %586 = vmatpush.msra.mxu0 0.0
    %587 = vmatpush.msra.mxu0 %v294
    %588 = vmatpush.msra.mxu0 %v293
    %589 = vmatmul.f32.gmra.mxu0 %v568
    %v590 = vpop.f32.mrf.mxu0
    %v591 = vadd.f32 0.0, %v590
    %592 = vmatmul.f32.gmra.mxu0 %v571
    %v593 = vpop.f32.mrf.mxu0
    %v594 = vadd.f32 0.0, %v593
    %595 = vdwg.mxu0
    %v597 = vsel %vm298, %v405, 0
    %v600 = vsel %vm298, %v431, 0
    %602 = vmatpush.msra.mxu0 0.0
    %603 = vmatpush.msra.mxu0 0.0
    %604 = vmatpush.msra.mxu0 0.0
    %605 = vmatpush.msra.mxu0 0.0
    %606 = vmatpush.msra.mxu0 0.0
    %607 = vmatpush.msra.mxu0 0.0
    %608 = vmatpush.msra.mxu0 0.0
    %609 = vmatpush.msra.mxu0 0.0
    %610 = vmatpush.msra.mxu0 0.0
    %611 = vmatpush.msra.mxu0 0.0
    %612 = vmatpush.msra.mxu0 0.0
    %613 = vmatpush.msra.mxu0 0.0
    %614 = vmatpush.msra.mxu0 0.0
    %615 = vmatpush.msra.mxu0 0.0
    %616 = vmatpush.msra.mxu0 %v292
    %617 = vmatpush.msra.mxu0 %v291
    %618 = vmatmul.f32.gmra.mxu0 %v597
    %v619 = vpop.f32.mrf.mxu0
    %v620 = vadd.f32 %v591, %v619
    %621 = vmatmul.f32.gmra.mxu0 %v600
    %v622 = vpop.f32.mrf.mxu0
    %v623 = vadd.f32 %v594, %v622
    %624 = vdwg.mxu0
    %v625 = vld [vmem:[%s7] sm:$0x1]
    %v627 = vperm.slane %v625, 0
    %v629 = vadd.f32 %v620, %v627
    %v630 = vadd.f32 %v623, %v627
    %v631 = vadd.f32 %v629, %v249
    %v632 = vadd.f32 %v630, %v250
    %v633 = vld [vmem:[#allocation10] sm:$0x1]
    %v634 = vld [vmem:[%s9] sm:$0x1]
    %v635 = vsel %vm189, %v631, 0.0
    %636 = vadd.xlane.f32.xlu0 %v635
    %v637 = vpop.xlane.xlu0 %636
    %v638 = vsel %vm189, %v632, 0.0
    %639 = vadd.xlane.f32.xlu0 %v638
    %v640 = vpop.xlane.xlu0 %639
    %v641 = vmul.f32 %v637, %v202
    %v642 = vmul.f32 %v640, %v202
    %v643 = vsub.f32 %v631, %v641
    %v644 = vsub.f32 %v632, %v642
    %v645 = vmul.f32 %v643, %v643
    %v646 = vmul.f32 %v644, %v644
    %v647 = vsel %vm189, %v645, 0.0
    %648 = vadd.xlane.f32.xlu0 %v647
    %v649 = vpop.xlane.xlu0 %648
    %v650 = vsel %vm189, %v646, 0.0
    %651 = vadd.xlane.f32.xlu0 %v650
    %v652 = vpop.xlane.xlu0 %651
    %v653 = vmul.f32 %v649, %v202
    %v654 = vmul.f32 %v652, %v202
    %v655 = vadd.f32 %v653, 1e-12
    %v656 = vadd.f32 %v654, 1e-12
    %v657 = vrsqrt.pop %v655
    %v658 = vmul.f32 %v657, %v655
    %v659 = vmul.f32 %v658, %v657
    %v660 = vmul.f32 0.5, %v659
    %v661 = vsub.f32 1.5, %v660
    %v662 = vmul.f32 %v657, %v661
    %vm663 = vweird.f32 %v655
    %vm664 = vweird.f32 %v657
    %vm665 = vmor %vm663, %vm664
    %v666 = vsel %vm665, %v657, %v662
    %v667 = vrsqrt.pop %v656
    %v668 = vmul.f32 %v667, %v656
    %v669 = vmul.f32 %v668, %v667
    %v670 = vmul.f32 0.5, %v669
    %v671 = vsub.f32 1.5, %v670
    %v672 = vmul.f32 %v667, %v671
    %vm673 = vweird.f32 %v656
    %vm674 = vweird.f32 %v667
    %vm675 = vmor %vm673, %vm674
    %v676 = vsel %vm675, %v667, %v672
    %v677 = vmul.f32 %v643, %v666
    %v678 = vmul.f32 %v644, %v676
    %v680 = vperm.slane %v633, 0
    %v682 = vmul.f32 %v677, %v680
    %v683 = vmul.f32 %v678, %v680
    %v685 = vperm.slane %v634, 0
    %v687 = vadd.f32 %v682, %v685
    %v688 = vadd.f32 %v683, %v685
    %v689 = vld [vmem:[%s10] sm:$0xff]
    %v690 = vld [vmem:[%s10 + $0x8] sm:$0xff]
    %v691 = vld [vmem:[%s10 + $0x10] sm:$0xff]
    %v692 = vld [vmem:[%s10 + $0x18] sm:$0xff]
    %v693 = vld [vmem:[%s11] sm:$0x1]
    %v695 = vperm.slane %v693, 0
    %v698 = vsel %vm189, %v687, 0
    %v701 = vsel %vm189, %v688, 0
    %703 = vmatpush.msra.mxu0 0.0
    %704 = vmatpush.msra.mxu0 0.0
    %705 = vmatpush.msra.mxu0 0.0
    %706 = vmatpush.msra.mxu0 0.0
    %707 = vmatpush.msra.mxu0 0.0
    %708 = vmatpush.msra.mxu0 0.0
    %709 = vmatpush.msra.mxu0 0.0
    %710 = vmatpush.msra.mxu0 0.0
    %711 = vmatpush.msra.mxu0 0.0
    %712 = vmatpush.msra.mxu0 0.0
    %713 = vmatpush.msra.mxu0 0.0
    %714 = vmatpush.msra.mxu0 0.0
    %715 = vmatpush.msra.mxu0 %v692
    %716 = vmatpush.msra.mxu0 %v691
    %717 = vmatpush.msra.mxu0 %v690
    %718 = vmatpush.msra.mxu0 %v689
    %719 = vmatmul.f32.gmra.mxu0 %v698
    %v720 = vpop.f32.mrf.mxu0
    %v721 = vadd.f32 %v695, %v720
    %722 = vmatmul.f32.gmra.mxu0 %v701
    %v723 = vpop.f32.mrf.mxu0
    %v724 = vadd.f32 %v695, %v723
    %725 = vdwg.mxu0
    %v726 = vmul.f32 %v721, 0.5
    %v727 = vmul.f32 %v724, 0.5
    %v728 = vmul.f32 %v721, 0.70710677
    %v729 = vmul.f32 %v724, 0.70710677
    %v730 = vmul.f32 %v728, %v728
    %v731 = vmin.f32 16.0, %v730
    %v732 = vmul.f32 %v731, 2.1237322e-06
    %v733 = vadd.f32 %v732, 0.00028619796
    %v734 = vmul.f32 %v731, %v733
    %v735 = vadd.f32 %v734, 0.0036580483
    %v736 = vmul.f32 %v731, %v735
    %v737 = vadd.f32 %v736, 0.05243302
    %v738 = vmul.f32 %v731, %v737
    %v739 = vadd.f32 %v738, 0.18741608
    %v740 = vmul.f32 %v731, %v739
    %v741 = vadd.f32 %v740, 1.1283791
    %v742 = vmul.f32 %v728, %v741
    %v743 = vmul.f32 %v731, 3.8918573e-05
    %v744 = vadd.f32 %v743, 0.001143296
    %v745 = vmul.f32 %v731, %v744
    %v746 = vadd.f32 %v745, 0.014752088
    %v747 = vmul.f32 %v731, %v746
    %v748 = vadd.f32 %v747, 0.112945676
    %v749 = vmul.f32 %v731, %v748
    %v750 = vadd.f32 %v749, 0.4994258
    %v751 = vmul.f32 %v731, %v750
    %v752 = vadd.f32 %v751, 1.0
    %v753 = vrcp.pop %v752
    %v754 = vmul.f32 %v752, %v753
    %v755 = vsub.f32 1.0, %v754
    %v756 = vmul.f32 %v753, %v755
    %v757 = vadd.f32 %v753, %v756
    %vm758 = vweird.f32 %v752
    %vm759 = vweird.f32 %v753
    %vm760 = vmor %vm758, %vm759
    %v761 = vsel %vm760, %v753, %v757
    %v762 = vand.u32 2147483647, %v752
    %vm763 = vcmp.eq.f32.partialorder %v762, 8.507059e+37
    %v764 = vand.u32 %v752, 2147483648
    %v765 = vor.u32 1.1754944e-38, %v764
    %v766 = vsel %vm763, %v765, %v761
    %v767 = vmul.f32 %v742, %v766
    %v768 = vmin.f32 %v767, 1.0
    %v769 = vmax.f32 %v768, -1.0
    %v770 = vmul.f32 %v729, %v729
    %v771 = vmin.f32 16.0, %v770
    %v772 = vmul.f32 %v771, 2.1237322e-06
    %v773 = vadd.f32 %v772, 0.00028619796
    %v774 = vmul.f32 %v771, %v773
    %v775 = vadd.f32 %v774, 0.0036580483
    %v776 = vmul.f32 %v771, %v775
    %v777 = vadd.f32 %v776, 0.05243302
    %v778 = vmul.f32 %v771, %v777
    %v779 = vadd.f32 %v778, 0.18741608
    %v780 = vmul.f32 %v771, %v779
    %v781 = vadd.f32 %v780, 1.1283791
    %v782 = vmul.f32 %v729, %v781
    %v783 = vmul.f32 %v771, 3.8918573e-05
    %v784 = vadd.f32 %v783, 0.001143296
    %v785 = vmul.f32 %v771, %v784
    %v786 = vadd.f32 %v785, 0.014752088
    %v787 = vmul.f32 %v771, %v786
    %v788 = vadd.f32 %v787, 0.112945676
    %v789 = vmul.f32 %v771, %v788
    %v790 = vadd.f32 %v789, 0.4994258
    %v791 = vmul.f32 %v771, %v790
    %v792 = vadd.f32 %v791, 1.0
    %v793 = vrcp.pop %v792
    %v794 = vmul.f32 %v792, %v793
    %v795 = vsub.f32 1.0, %v794
    %v796 = vmul.f32 %v793, %v795
    %v797 = vadd.f32 %v793, %v796
    %vm798 = vweird.f32 %v792
    %vm799 = vweird.f32 %v793
    %vm800 = vmor %vm798, %vm799
    %v801 = vsel %vm800, %v793, %v797
    %v802 = vand.u32 2147483647, %v792
    %vm803 = vcmp.eq.f32.partialorder %v802, 8.507059e+37
    %v804 = vand.u32 %v792, 2147483648
    %v805 = vor.u32 1.1754944e-38, %v804
    %v806 = vsel %vm803, %v805, %v801
    %v807 = vmul.f32 %v782, %v806
    %v808 = vmin.f32 %v807, 1.0
    %v809 = vmax.f32 %v808, -1.0
    %v810 = vadd.f32 %v769, 1.0
    %v811 = vadd.f32 %v809, 1.0
    %v812 = vmul.f32 %v726, %v810
    %v813 = vmul.f32 %v727, %v811
    %v814 = vld [vmem:[%s12] sm:$0xff]
    %v815 = vld [vmem:[%s12 + $0x8] sm:$0xff]
    %v816 = vld [vmem:[%s12 + $0x10] sm:$0xff]
    %v817 = vld [vmem:[%s12 + $0x18] sm:$0xff]
    %v818 = vld [vmem:[%s12 + $0x20] sm:$0xff]
    %v819 = vld [vmem:[%s12 + $0x28] sm:$0xff]
    %v820 = vld [vmem:[%s12 + $0x30] sm:$0xff]
    %v821 = vld [vmem:[%s12 + $0x38] sm:$0xff]
    %v822 = vld [vmem:[%s13] sm:$0x1]
    %v824 = vperm.slane %v822, 0
    %vm826 = vcmask 523264
    %v828 = vsel %vm826, %v812, 0
    %v831 = vsel %vm826, %v813, 0
    %833 = vmatpush.msra.mxu0 0.0
    %834 = vmatpush.msra.mxu0 0.0
    %835 = vmatpush.msra.mxu0 0.0
    %836 = vmatpush.msra.mxu0 0.0
    %837 = vmatpush.msra.mxu0 0.0
    %838 = vmatpush.msra.mxu0 0.0
    %839 = vmatpush.msra.mxu0 0.0
    %840 = vmatpush.msra.mxu0 0.0
    %841 = vmatpush.msra.mxu0 %v821
    %842 = vmatpush.msra.mxu0 %v820
    %843 = vmatpush.msra.mxu0 %v819
    %844 = vmatpush.msra.mxu0 %v818
    %845 = vmatpush.msra.mxu0 %v817
    %846 = vmatpush.msra.mxu0 %v816
    %847 = vmatpush.msra.mxu0 %v815
    %848 = vmatpush.msra.mxu0 %v814
    %849 = vmatmul.f32.gmra.mxu0 %v828
    %v850 = vpop.f32.mrf.mxu0
    %v851 = vadd.f32 %v824, %v850
    %852 = vmatmul.f32.gmra.mxu0 %v831
    %v853 = vpop.f32.mrf.mxu0
    %v854 = vadd.f32 %v824, %v853
    %855 = vdwg.mxu0
    %v856 = vadd.f32 %v851, %v687
    %v857 = vadd.f32 %v854, %v688
    %v858 = vld [vmem:[#allocation11] sm:$0x1]
    %v859 = vld [vmem:[%s15] sm:$0x1]
    %v860 = vsel %vm189, %v856, 0.0
    %861 = vadd.xlane.f32.xlu0 %v860
    %v862 = vpop.xlane.xlu0 %861
    %v863 = vsel %vm189, %v857, 0.0
    %864 = vadd.xlane.f32.xlu0 %v863
    %v865 = vpop.xlane.xlu0 %864
    %v866 = vmul.f32 %v862, %v202
    %v867 = vmul.f32 %v865, %v202
    %v868 = vsub.f32 %v856, %v866
    %v869 = vsub.f32 %v857, %v867
    %v870 = vmul.f32 %v868, %v868
    %v871 = vmul.f32 %v869, %v869
    %v872 = vsel %vm189, %v870, 0.0
    %873 = vadd.xlane.f32.xlu0 %v872
    %v874 = vpop.xlane.xlu0 %873
    %v875 = vsel %vm189, %v871, 0.0
    %876 = vadd.xlane.f32.xlu0 %v875
    %v877 = vpop.xlane.xlu0 %876
    %v878 = vmul.f32 %v874, %v202
    %v879 = vmul.f32 %v877, %v202
    %v880 = vadd.f32 %v878, 1e-12
    %v881 = vadd.f32 %v879, 1e-12
    %v882 = vrsqrt.pop %v880
    %v883 = vmul.f32 %v882, %v880
    %v884 = vmul.f32 %v883, %v882
    %v885 = vmul.f32 0.5, %v884
    %v886 = vsub.f32 1.5, %v885
    %v887 = vmul.f32 %v882, %v886
    %vm888 = vweird.f32 %v880
    %vm889 = vweird.f32 %v882
    %vm890 = vmor %vm888, %vm889
    %v891 = vsel %vm890, %v882, %v887
    %v892 = vrsqrt.pop %v881
    %v893 = vmul.f32 %v892, %v881
    %v894 = vmul.f32 %v893, %v892
    %v895 = vmul.f32 0.5, %v894
    %v896 = vsub.f32 1.5, %v895
    %v897 = vmul.f32 %v892, %v896
    %vm898 = vweird.f32 %v881
    %vm899 = vweird.f32 %v892
    %vm900 = vmor %vm898, %vm899
    %v901 = vsel %vm900, %v892, %v897
    %v902 = vmul.f32 %v868, %v891
    %v903 = vmul.f32 %v869, %v901
    %v905 = vperm.slane %v858, 0
    %v907 = vmul.f32 %v902, %v905
    %v908 = vmul.f32 %v903, %v905
    %v910 = vperm.slane %v859, 0
    %v912 = vadd.f32 %v907, %v910
    %v913 = vadd.f32 %v908, %v910
    %s914 = scalar_lea.vmem %s4, 32
    %v915 = vld [vmem:[%s914] sm:$0xff]
    %v916 = vld [vmem:[%s914 + $0x8] sm:$0xff]
    %v917 = vld [vmem:[%s914 + $0x10] sm:$0xff]
    %v918 = vld [vmem:[%s914 + $0x18] sm:$0xff]
    %s919 = scalar_lea.vmem %s5, 1
    %v920 = vld [vmem:[%s919] sm:$0x1]
    %v922 = vperm.slane %v920, 0
    %v925 = vsel %vm189, %v912, 0
    %v928 = vsel %vm189, %v913, 0
    %930 = vmatpush.msra.mxu0 0.0
    %931 = vmatpush.msra.mxu0 0.0
    %932 = vmatpush.msra.mxu0 0.0
    %933 = vmatpush.msra.mxu0 0.0
    %934 = vmatpush.msra.mxu0 0.0
    %935 = vmatpush.msra.mxu0 0.0
    %936 = vmatpush.msra.mxu0 0.0
    %937 = vmatpush.msra.mxu0 0.0
    %938 = vmatpush.msra.mxu0 0.0
    %939 = vmatpush.msra.mxu0 0.0
    %940 = vmatpush.msra.mxu0 0.0
    %941 = vmatpush.msra.mxu0 0.0
    %942 = vmatpush.msra.mxu0 %v918
    %943 = vmatpush.msra.mxu0 %v917
    %944 = vmatpush.msra.mxu0 %v916
    %945 = vmatpush.msra.mxu0 %v915
    %946 = vmatmul.f32.gmra.mxu0 %v925
    %v947 = vpop.f32.mrf.mxu0
    %v948 = vadd.f32 %v922, %v947
    %949 = vmatmul.f32.gmra.mxu0 %v928
    %v950 = vpop.f32.mrf.mxu0
    %v951 = vadd.f32 %v922, %v950
    %952 = vdwg.mxu0
    %s953 = scalar_lea.vmem %s6, 32
    %v954 = vld [vmem:[%s953] sm:$0xff]
    %v955 = vld [vmem:[%s953 + $0x8] sm:$0xff]
    %v956 = vld [vmem:[%s953 + $0x10] sm:$0xff]
    %v957 = vld [vmem:[%s953 + $0x18] sm:$0xff]
    %959 = vrot.lane.b32.xlu0 %v948, 96
    %v960 = vpop.permute.xlu0 %959
    %v961 = vsel %vm298, %v948, 0
    %v963 = vsel %vm298, %v960, 0
    %965 = vmatpush.xpose.msra.mxu0 0.0
    %966 = vmatpush.xpose.msra.mxu0 0.0
    %967 = vmatpush.xpose.msra.mxu0 0.0
    %968 = vmatpush.xpose.msra.mxu0 0.0
    %969 = vmatpush.xpose.msra.mxu0 0.0
    %970 = vmatpush.xpose.msra.mxu0 0.0
    %971 = vmatpush.xpose.msra.mxu0 0.0
    %972 = vmatpush.xpose.msra.mxu0 0.0
    %973 = vmatpush.xpose.msra.mxu0 0.0
    %974 = vmatpush.xpose.msra.mxu0 0.0
    %975 = vmatpush.xpose.msra.mxu0 0.0
    %976 = vmatpush.xpose.msra.mxu0 0.0
    %977 = vmatpush.xpose.msra.mxu0 0.0
    %978 = vmatpush.xpose.msra.mxu0 0.0
    %979 = vmatpush.xpose.msra.mxu0 0.0
    %980 = vmatpush.xpose.msra.mxu0 %v963
    %981 = vmatmul.f32.gmra.mxu0 %v961
    %v982 = vpop.f32.mrf.mxu0
    %v983 = vadd.f32 0.0, %v982
    %984 = vdwg.mxu0
    %986 = vrot.lane.b32.xlu0 %v951, 96
    %v987 = vpop.permute.xlu0 %986
    %v988 = vsel %vm298, %v951, 0
    %v990 = vsel %vm298, %v987, 0
    %992 = vmatpush.xpose.msra.mxu0 0.0
    %993 = vmatpush.xpose.msra.mxu0 0.0
    %994 = vmatpush.xpose.msra.mxu0 0.0
    %995 = vmatpush.xpose.msra.mxu0 0.0
    %996 = vmatpush.xpose.msra.mxu0 0.0
    %997 = vmatpush.xpose.msra.mxu0 0.0
    %998 = vmatpush.xpose.msra.mxu0 0.0
    %999 = vmatpush.xpose.msra.mxu0 0.0
    %1000 = vmatpush.xpose.msra.mxu0 0.0
    %1001 = vmatpush.xpose.msra.mxu0 0.0
    %1002 = vmatpush.xpose.msra.mxu0 0.0
    %1003 = vmatpush.xpose.msra.mxu0 0.0
    %1004 = vmatpush.xpose.msra.mxu0 0.0
    %1005 = vmatpush.xpose.msra.mxu0 0.0
    %1006 = vmatpush.xpose.msra.mxu0 0.0
    %1007 = vmatpush.xpose.msra.mxu0 %v990
    %1008 = vmatmul.f32.gmra.mxu0 %v988
    %v1009 = vpop.f32.mrf.mxu0
    %v1010 = vadd.f32 0.0, %v1009
    %1011 = vdwg.mxu0
    %v1012 = vmul.f32 %v983, 0.25
    %v1013 = vmul.f32 %v1010, 0.25
    %v1014 = vadd.f32 %v1012, %v352
    %v1015 = vadd.f32 %v1013, %v353
    %v1016 = vsel %vm358, %v1014, -inf
    %1017 = vmax.xlane.f32.xlu0 %v1016
    %v1018 = vpop.xlane.xlu0 %1017
    %v1019 = vsel %vm358, %v1015, -inf
    %1020 = vmax.xlane.f32.xlu0 %v1019
    %v1021 = vpop.xlane.xlu0 %1020
    %v1022 = vsub.f32 %v1014, %v1018
    %v1023 = vsub.f32 %v1015, %v1021
    %v1024 = vmul.f32 %v1022, 1.442695
    %v1025 = vpow.pop %v1024
    %v1026 = vmul.f32 %v1023, 1.442695
    %v1027 = vpow.pop %v1026
    %v1028 = vsel %vm358, %v1025, 0.0
    %1029 = vadd.xlane.f32.xlu0 %v1028
    %v1030 = vpop.xlane.xlu0 %1029
    %v1031 = vsel %vm358, %v1027, 0.0
    %1032 = vadd.xlane.f32.xlu0 %v1031
    %v1033 = vpop.xlane.xlu0 %1032
    %v1034 = vrcp.pop %v1030
    %v1035 = vrcp.pop %v1033
    %v1036 = vmul.f32 %v1025, %v1034
    %v1037 = vmul.f32 %v1027, %v1035
    %1038 = vrot.lane.b32.xlu0 %v948, 64
    %v1039 = vpop.permute.xlu0 %1038
    %v1042 = vsel %vm358, %v1036, 0
    %1044 = vmatpush.msra.mxu0 0.0
    %1045 = vmatpush.msra.mxu0 0.0
    %1046 = vmatpush.msra.mxu0 0.0
    %1047 = vmatpush.msra.mxu0 0.0
    %1048 = vmatpush.msra.mxu0 0.0
    %1049 = vmatpush.msra.mxu0 0.0
    %1050 = vmatpush.msra.mxu0 0.0
    %1051 = vmatpush.msra.mxu0 0.0
    %1052 = vmatpush.msra.mxu0 0.0
    %1053 = vmatpush.msra.mxu0 0.0
    %1054 = vmatpush.msra.mxu0 0.0
    %1055 = vmatpush.msra.mxu0 0.0
    %1056 = vmatpush.msra.mxu0 0.0
    %1057 = vmatpush.msra.mxu0 0.0
    %1058 = vmatpush.msra.mxu0 0.0
    %1059 = vmatpush.msra.mxu0 %v1039
    %1060 = vmatmul.f32.gmra.mxu0 %v1042
    %v1061 = vpop.f32.mrf.mxu0
    %v1062 = vadd.f32 0.0, %v1061
    %1063 = vdwg.mxu0
    %1064 = vrot.lane.b32.xlu0 %v951, 64
    %v1065 = vpop.permute.xlu0 %1064
    %v1068 = vsel %vm358, %v1037, 0
    %1070 = vmatpush.msra.mxu0 0.0
    %1071 = vmatpush.msra.mxu0 0.0
    %1072 = vmatpush.msra.mxu0 0.0
    %1073 = vmatpush.msra.mxu0 0.0
    %1074 = vmatpush.msra.mxu0 0.0
    %1075 = vmatpush.msra.mxu0 0.0
    %1076 = vmatpush.msra.mxu0 0.0
    %1077 = vmatpush.msra.mxu0 0.0
    %1078 = vmatpush.msra.mxu0 0.0
    %1079 = vmatpush.msra.mxu0 0.0
    %1080 = vmatpush.msra.mxu0 0.0
    %1081 = vmatpush.msra.mxu0 0.0
    %1082 = vmatpush.msra.mxu0 0.0
    %1083 = vmatpush.msra.mxu0 0.0
    %1084 = vmatpush.msra.mxu0 0.0
    %1085 = vmatpush.msra.mxu0 %v1065
    %1086 = vmatmul.f32.gmra.mxu0 %v1068
    %v1087 = vpop.f32.mrf.mxu0
    %v1088 = vadd.f32 0.0, %v1087
    %1089 = vdwg.mxu0
    %1090 = vrot.lane.b32.xlu0 %v948, 112
    %v1091 = vpop.permute.xlu0 %1090
    %1092 = vrot.lane.b32.xlu0 %v948, 80
    %v1093 = vpop.permute.xlu0 %1092
    %v1094 = vsel %vm298, %v1091, 0
    %v1096 = vsel %vm298, %v1093, 0
    %1098 = vmatpush.xpose.msra.mxu0 0.0
    %1099 = vmatpush.xpose.msra.mxu0 0.0
    %1100 = vmatpush.xpose.msra.mxu0 0.0
    %1101 = vmatpush.xpose.msra.mxu0 0.0
    %1102 = vmatpush.xpose.msra.mxu0 0.0
    %1103 = vmatpush.xpose.msra.mxu0 0.0
    %1104 = vmatpush.xpose.msra.mxu0 0.0
    %1105 = vmatpush.xpose.msra.mxu0 0.0
    %1106 = vmatpush.xpose.msra.mxu0 0.0
    %1107 = vmatpush.xpose.msra.mxu0 0.0
    %1108 = vmatpush.xpose.msra.mxu0 0.0
    %1109 = vmatpush.xpose.msra.mxu0 0.0
    %1110 = vmatpush.xpose.msra.mxu0 0.0
    %1111 = vmatpush.xpose.msra.mxu0 0.0
    %1112 = vmatpush.xpose.msra.mxu0 0.0
    %1113 = vmatpush.xpose.msra.mxu0 %v1096
    %1114 = vmatmul.f32.gmra.mxu0 %v1094
    %v1115 = vpop.f32.mrf.mxu0
    %v1116 = vadd.f32 0.0, %v1115
    %1117 = vdwg.mxu0
    %1118 = vrot.lane.b32.xlu0 %v951, 112
    %v1119 = vpop.permute.xlu0 %1118
    %1120 = vrot.lane.b32.xlu0 %v951, 80
    %v1121 = vpop.permute.xlu0 %1120
    %v1122 = vsel %vm298, %v1119, 0
    %v1124 = vsel %vm298, %v1121, 0
    %1126 = vmatpush.xpose.msra.mxu0 0.0
    %1127 = vmatpush.xpose.msra.mxu0 0.0
    %1128 = vmatpush.xpose.msra.mxu0 0.0
    %1129 = vmatpush.xpose.msra.mxu0 0.0
    %1130 = vmatpush.xpose.msra.mxu0 0.0
    %1131 = vmatpush.xpose.msra.mxu0 0.0
    %1132 = vmatpush.xpose.msra.mxu0 0.0
    %1133 = vmatpush.xpose.msra.mxu0 0.0
    %1134 = vmatpush.xpose.msra.mxu0 0.0
    %1135 = vmatpush.xpose.msra.mxu0 0.0
    %1136 = vmatpush.xpose.msra.mxu0 0.0
    %1137 = vmatpush.xpose.msra.mxu0 0.0
    %1138 = vmatpush.xpose.msra.mxu0 0.0
    %1139 = vmatpush.xpose.msra.mxu0 0.0
    %1140 = vmatpush.xpose.msra.mxu0 0.0
    %1141 = vmatpush.xpose.msra.mxu0 %v1124
    %1142 = vmatmul.f32.gmra.mxu0 %v1122
    %v1143 = vpop.f32.mrf.mxu0
    %v1144 = vadd.f32 0.0, %v1143
    %1145 = vdwg.mxu0
    %v1146 = vmul.f32 %v1116, 0.25
    %v1147 = vmul.f32 %v1144, 0.25
    %v1148 = vadd.f32 %v1146, %v352
    %v1149 = vadd.f32 %v1147, %v353
    %v1150 = vsel %vm358, %v1148, -inf
    %1151 = vmax.xlane.f32.xlu0 %v1150
    %v1152 = vpop.xlane.xlu0 %1151
    %v1153 = vsel %vm358, %v1149, -inf
    %1154 = vmax.xlane.f32.xlu0 %v1153
    %v1155 = vpop.xlane.xlu0 %1154
    %v1156 = vsub.f32 %v1148, %v1152
    %v1157 = vsub.f32 %v1149, %v1155
    %v1158 = vmul.f32 %v1156, 1.442695
    %v1159 = vpow.pop %v1158
    %v1160 = vmul.f32 %v1157, 1.442695
    %v1161 = vpow.pop %v1160
    %v1162 = vsel %vm358, %v1159, 0.0
    %1163 = vadd.xlane.f32.xlu0 %v1162
    %v1164 = vpop.xlane.xlu0 %1163
    %v1165 = vsel %vm358, %v1161, 0.0
    %1166 = vadd.xlane.f32.xlu0 %v1165
    %v1167 = vpop.xlane.xlu0 %1166
    %v1168 = vrcp.pop %v1164
    %v1169 = vrcp.pop %v1167
    %v1170 = vmul.f32 %v1159, %v1168
    %v1171 = vmul.f32 %v1161, %v1169
    %1172 = vrot.lane.b32.xlu0 %v948, 48
    %v1173 = vpop.permute.xlu0 %1172
    %v1176 = vsel %vm358, %v1170, 0
    %1178 = vmatpush.msra.mxu0 0.0
    %1179 = vmatpush.msra.mxu0 0.0
    %1180 = vmatpush.msra.mxu0 0.0
    %1181 = vmatpush.msra.mxu0 0.0
    %1182 = vmatpush.msra.mxu0 0.0
    %1183 = vmatpush.msra.mxu0 0.0
    %1184 = vmatpush.msra.mxu0 0.0
    %1185 = vmatpush.msra.mxu0 0.0
    %1186 = vmatpush.msra.mxu0 0.0
    %1187 = vmatpush.msra.mxu0 0.0
    %1188 = vmatpush.msra.mxu0 0.0
    %1189 = vmatpush.msra.mxu0 0.0
    %1190 = vmatpush.msra.mxu0 0.0
    %1191 = vmatpush.msra.mxu0 0.0
    %1192 = vmatpush.msra.mxu0 0.0
    %1193 = vmatpush.msra.mxu0 %v1173
    %1194 = vmatmul.f32.gmra.mxu0 %v1176
    %v1195 = vpop.f32.mrf.mxu0
    %v1196 = vadd.f32 0.0, %v1195
    %1197 = vdwg.mxu0
    %1198 = vrot.lane.b32.xlu0 %v951, 48
    %v1199 = vpop.permute.xlu0 %1198
    %v1202 = vsel %vm358, %v1171, 0
    %1204 = vmatpush.msra.mxu0 0.0
    %1205 = vmatpush.msra.mxu0 0.0
    %1206 = vmatpush.msra.mxu0 0.0
    %1207 = vmatpush.msra.mxu0 0.0
    %1208 = vmatpush.msra.mxu0 0.0
    %1209 = vmatpush.msra.mxu0 0.0
    %1210 = vmatpush.msra.mxu0 0.0
    %1211 = vmatpush.msra.mxu0 0.0
    %1212 = vmatpush.msra.mxu0 0.0
    %1213 = vmatpush.msra.mxu0 0.0
    %1214 = vmatpush.msra.mxu0 0.0
    %1215 = vmatpush.msra.mxu0 0.0
    %1216 = vmatpush.msra.mxu0 0.0
    %1217 = vmatpush.msra.mxu0 0.0
    %1218 = vmatpush.msra.mxu0 0.0
    %1219 = vmatpush.msra.mxu0 %v1199
    %1220 = vmatmul.f32.gmra.mxu0 %v1202
    %v1221 = vpop.f32.mrf.mxu0
    %v1222 = vadd.f32 0.0, %v1221
    %1223 = vdwg.mxu0
    %v1225 = vsel %vm298, %v1196, 0
    %v1228 = vsel %vm298, %v1222, 0
    %1230 = vmatpush.msra.mxu0 0.0
    %1231 = vmatpush.msra.mxu0 0.0
    %1232 = vmatpush.msra.mxu0 0.0
    %1233 = vmatpush.msra.mxu0 0.0
    %1234 = vmatpush.msra.mxu0 0.0
    %1235 = vmatpush.msra.mxu0 0.0
    %1236 = vmatpush.msra.mxu0 0.0
    %1237 = vmatpush.msra.mxu0 0.0
    %1238 = vmatpush.msra.mxu0 0.0
    %1239 = vmatpush.msra.mxu0 0.0
    %1240 = vmatpush.msra.mxu0 0.0
    %1241 = vmatpush.msra.mxu0 0.0
    %1242 = vmatpush.msra.mxu0 0.0
    %1243 = vmatpush.msra.mxu0 0.0
    %1244 = vmatpush.msra.mxu0 %v957
    %1245 = vmatpush.msra.mxu0 %v956
    %1246 = vmatmul.f32.gmra.mxu0 %v1225
    %v1247 = vpop.f32.mrf.mxu0
    %v1248 = vadd.f32 0.0, %v1247
    %1249 = vmatmul.f32.gmra.mxu0 %v1228
    %v1250 = vpop.f32.mrf.mxu0
    %v1251 = vadd.f32 0.0, %v1250
    %1252 = vdwg.mxu0
    %v1254 = vsel %vm298, %v1062, 0
    %v1257 = vsel %vm298, %v1088, 0
    %1259 = vmatpush.msra.mxu0 0.0
    %1260 = vmatpush.msra.mxu0 0.0
    %1261 = vmatpush.msra.mxu0 0.0
    %1262 = vmatpush.msra.mxu0 0.0
    %1263 = vmatpush.msra.mxu0 0.0
    %1264 = vmatpush.msra.mxu0 0.0
    %1265 = vmatpush.msra.mxu0 0.0
    %1266 = vmatpush.msra.mxu0 0.0
    %1267 = vmatpush.msra.mxu0 0.0
    %1268 = vmatpush.msra.mxu0 0.0
    %1269 = vmatpush.msra.mxu0 0.0
    %1270 = vmatpush.msra.mxu0 0.0
    %1271 = vmatpush.msra.mxu0 0.0
    %1272 = vmatpush.msra.mxu0 0.0
    %1273 = vmatpush.msra.mxu0 %v955
    %1274 = vmatpush.msra.mxu0 %v954
    %1275 = vmatmul.f32.gmra.mxu0 %v1254
    %v1276 = vpop.f32.mrf.mxu0
    %v1277 = vadd.f32 %v1248, %v1276
    %1278 = vmatmul.f32.gmra.mxu0 %v1257
    %v1279 = vpop.f32.mrf.mxu0
    %v1280 = vadd.f32 %v1251, %v1279
    %1281 = vdwg.mxu0
    %s1282 = scalar_lea.vmem %s7, 1
    %v1283 = vld [vmem:[%s1282] sm:$0x1]
    %v1285 = vperm.slane %v1283, 0
    %v1287 = vadd.f32 %v1277, %v1285
    %v1288 = vadd.f32 %v1280, %v1285
    %v1289 = vadd.f32 %v1287, %v912
    %v1290 = vadd.f32 %v1288, %v913
    %s1291 = scalar_lea.vmem [#allocation10], 1
    %v1292 = vld [vmem:[%s1291] sm:$0x1]
    %s1293 = scalar_lea.vmem %s9, 1
    %v1294 = vld [vmem:[%s1293] sm:$0x1]
    %v1295 = vsel %vm189, %v1289, 0.0
    %1296 = vadd.xlane.f32.xlu0 %v1295
    %v1297 = vpop.xlane.xlu0 %1296
    %v1298 = vsel %vm189, %v1290, 0.0
    %1299 = vadd.xlane.f32.xlu0 %v1298
    %v1300 = vpop.xlane.xlu0 %1299
    %v1301 = vmul.f32 %v1297, %v202
    %v1302 = vmul.f32 %v1300, %v202
    %v1303 = vsub.f32 %v1289, %v1301
    %v1304 = vsub.f32 %v1290, %v1302
    %v1305 = vmul.f32 %v1303, %v1303
    %v1306 = vmul.f32 %v1304, %v1304
    %v1307 = vsel %vm189, %v1305, 0.0
    %1308 = vadd.xlane.f32.xlu0 %v1307
    %v1309 = vpop.xlane.xlu0 %1308
    %v1310 = vsel %vm189, %v1306, 0.0
    %1311 = vadd.xlane.f32.xlu0 %v1310
    %v1312 = vpop.xlane.xlu0 %1311
    %v1313 = vmul.f32 %v1309, %v202
    %v1314 = vmul.f32 %v1312, %v202
    %v1315 = vadd.f32 %v1313, 1e-12
    %v1316 = vadd.f32 %v1314, 1e-12
    %v1317 = vrsqrt.pop %v1315
    %v1318 = vmul.f32 %v1317, %v1315
    %v1319 = vmul.f32 %v1318, %v1317
    %v1320 = vmul.f32 0.5, %v1319
    %v1321 = vsub.f32 1.5, %v1320
    %v1322 = vmul.f32 %v1317, %v1321
    %vm1323 = vweird.f32 %v1315
    %vm1324 = vweird.f32 %v1317
    %vm1325 = vmor %vm1323, %vm1324
    %v1326 = vsel %vm1325, %v1317, %v1322
    %v1327 = vrsqrt.pop %v1316
    %v1328 = vmul.f32 %v1327, %v1316
    %v1329 = vmul.f32 %v1328, %v1327
    %v1330 = vmul.f32 0.5, %v1329
    %v1331 = vsub.f32 1.5, %v1330
    %v1332 = vmul.f32 %v1327, %v1331
    %vm1333 = vweird.f32 %v1316
    %vm1334 = vweird.f32 %v1327
    %vm1335 = vmor %vm1333, %vm1334
    %v1336 = vsel %vm1335, %v1327, %v1332
    %v1337 = vmul.f32 %v1303, %v1326
    %v1338 = vmul.f32 %v1304, %v1336
    %v1340 = vperm.slane %v1292, 0
    %v1342 = vmul.f32 %v1337, %v1340
    %v1343 = vmul.f32 %v1338, %v1340
    %v1345 = vperm.slane %v1294, 0
    %v1347 = vadd.f32 %v1342, %v1345
    %v1348 = vadd.f32 %v1343, %v1345
    %s1349 = scalar_lea.vmem %s10, 32
    %v1350 = vld [vmem:[%s1349] sm:$0xff]
    %v1351 = vld [vmem:[%s1349 + $0x8] sm:$0xff]
    %v1352 = vld [vmem:[%s1349 + $0x10] sm:$0xff]
    %v1353 = vld [vmem:[%s1349 + $0x18] sm:$0xff]
    %s1354 = scalar_lea.vmem %s11, 1
    %v1355 = vld [vmem:[%s1354] sm:$0x1]
    %v1357 = vperm.slane %v1355, 0
    %v1360 = vsel %vm189, %v1347, 0
    %v1363 = vsel %vm189, %v1348, 0
    %1365 = vmatpush.msra.mxu0 0.0
    %1366 = vmatpush.msra.mxu0 0.0
    %1367 = vmatpush.msra.mxu0 0.0
    %1368 = vmatpush.msra.mxu0 0.0
    %1369 = vmatpush.msra.mxu0 0.0
    %1370 = vmatpush.msra.mxu0 0.0
    %1371 = vmatpush.msra.mxu0 0.0
    %1372 = vmatpush.msra.mxu0 0.0
    %1373 = vmatpush.msra.mxu0 0.0
    %1374 = vmatpush.msra.mxu0 0.0
    %1375 = vmatpush.msra.mxu0 0.0
    %1376 = vmatpush.msra.mxu0 0.0
    %1377 = vmatpush.msra.mxu0 %v1353
    %1378 = vmatpush.msra.mxu0 %v1352
    %1379 = vmatpush.msra.mxu0 %v1351
    %1380 = vmatpush.msra.mxu0 %v1350
    %1381 = vmatmul.f32.gmra.mxu0 %v1360
    %v1382 = vpop.f32.mrf.mxu0
    %v1383 = vadd.f32 %v1357, %v1382
    %1384 = vmatmul.f32.gmra.mxu0 %v1363
    %v1385 = vpop.f32.mrf.mxu0
    %v1386 = vadd.f32 %v1357, %v1385
    %1387 = vdwg.mxu0
    %v1388 = vmul.f32 %v1383, 0.5
    %v1389 = vmul.f32 %v1386, 0.5
    %v1390 = vmul.f32 %v1383, 0.70710677
    %v1391 = vmul.f32 %v1386, 0.70710677
    %v1392 = vmul.f32 %v1390, %v1390
    %v1393 = vmin.f32 16.0, %v1392
    %v1394 = vmul.f32 %v1393, 2.1237322e-06
    %v1395 = vadd.f32 %v1394, 0.00028619796
    %v1396 = vmul.f32 %v1393, %v1395
    %v1397 = vadd.f32 %v1396, 0.0036580483
    %v1398 = vmul.f32 %v1393, %v1397
    %v1399 = vadd.f32 %v1398, 0.05243302
    %v1400 = vmul.f32 %v1393, %v1399
    %v1401 = vadd.f32 %v1400, 0.18741608
    %v1402 = vmul.f32 %v1393, %v1401
    %v1403 = vadd.f32 %v1402, 1.1283791
    %v1404 = vmul.f32 %v1390, %v1403
    %v1405 = vmul.f32 %v1393, 3.8918573e-05
    %v1406 = vadd.f32 %v1405, 0.001143296
    %v1407 = vmul.f32 %v1393, %v1406
    %v1408 = vadd.f32 %v1407, 0.014752088
    %v1409 = vmul.f32 %v1393, %v1408
    %v1410 = vadd.f32 %v1409, 0.112945676
    %v1411 = vmul.f32 %v1393, %v1410
    %v1412 = vadd.f32 %v1411, 0.4994258
    %v1413 = vmul.f32 %v1393, %v1412
    %v1414 = vadd.f32 %v1413, 1.0
    %v1415 = vrcp.pop %v1414
    %v1416 = vmul.f32 %v1414, %v1415
    %v1417 = vsub.f32 1.0, %v1416
    %v1418 = vmul.f32 %v1415, %v1417
    %v1419 = vadd.f32 %v1415, %v1418
    %vm1420 = vweird.f32 %v1414
    %vm1421 = vweird.f32 %v1415
    %vm1422 = vmor %vm1420, %vm1421
    %v1423 = vsel %vm1422, %v1415, %v1419
    %v1424 = vand.u32 2147483647, %v1414
    %vm1425 = vcmp.eq.f32.partialorder %v1424, 8.507059e+37
    %v1426 = vand.u32 %v1414, 2147483648
    %v1427 = vor.u32 1.1754944e-38, %v1426
    %v1428 = vsel %vm1425, %v1427, %v1423
    %v1429 = vmul.f32 %v1404, %v1428
    %v1430 = vmin.f32 %v1429, 1.0
    %v1431 = vmax.f32 %v1430, -1.0
    %v1432 = vmul.f32 %v1391, %v1391
    %v1433 = vmin.f32 16.0, %v1432
    %v1434 = vmul.f32 %v1433, 2.1237322e-06
    %v1435 = vadd.f32 %v1434, 0.00028619796
    %v1436 = vmul.f32 %v1433, %v1435
    %v1437 = vadd.f32 %v1436, 0.0036580483
    %v1438 = vmul.f32 %v1433, %v1437
    %v1439 = vadd.f32 %v1438, 0.05243302
    %v1440 = vmul.f32 %v1433, %v1439
    %v1441 = vadd.f32 %v1440, 0.18741608
    %v1442 = vmul.f32 %v1433, %v1441
    %v1443 = vadd.f32 %v1442, 1.1283791
    %v1444 = vmul.f32 %v1391, %v1443
    %v1445 = vmul.f32 %v1433, 3.8918573e-05
    %v1446 = vadd.f32 %v1445, 0.001143296
    %v1447 = vmul.f32 %v1433, %v1446
    %v1448 = vadd.f32 %v1447, 0.014752088
    %v1449 = vmul.f32 %v1433, %v1448
    %v1450 = vadd.f32 %v1449, 0.112945676
    %v1451 = vmul.f32 %v1433, %v1450
    %v1452 = vadd.f32 %v1451, 0.4994258
    %v1453 = vmul.f32 %v1433, %v1452
    %v1454 = vadd.f32 %v1453, 1.0
    %v1455 = vrcp.pop %v1454
    %v1456 = vmul.f32 %v1454, %v1455
    %v1457 = vsub.f32 1.0, %v1456
    %v1458 = vmul.f32 %v1455, %v1457
    %v1459 = vadd.f32 %v1455, %v1458
    %vm1460 = vweird.f32 %v1454
    %vm1461 = vweird.f32 %v1455
    %vm1462 = vmor %vm1460, %vm1461
    %v1463 = vsel %vm1462, %v1455, %v1459
    %v1464 = vand.u32 2147483647, %v1454
    %vm1465 = vcmp.eq.f32.partialorder %v1464, 8.507059e+37
    %v1466 = vand.u32 %v1454, 2147483648
    %v1467 = vor.u32 1.1754944e-38, %v1466
    %v1468 = vsel %vm1465, %v1467, %v1463
    %v1469 = vmul.f32 %v1444, %v1468
    %v1470 = vmin.f32 %v1469, 1.0
    %v1471 = vmax.f32 %v1470, -1.0
    %v1472 = vadd.f32 %v1431, 1.0
    %v1473 = vadd.f32 %v1471, 1.0
    %v1474 = vmul.f32 %v1388, %v1472
    %v1475 = vmul.f32 %v1389, %v1473
    %s1476 = scalar_lea.vmem %s12, 64
    %v1477 = vld [vmem:[%s1476] sm:$0xff]
    %v1478 = vld [vmem:[%s1476 + $0x8] sm:$0xff]
    %v1479 = vld [vmem:[%s1476 + $0x10] sm:$0xff]
    %v1480 = vld [vmem:[%s1476 + $0x18] sm:$0xff]
    %v1481 = vld [vmem:[%s1476 + $0x20] sm:$0xff]
    %v1482 = vld [vmem:[%s1476 + $0x28] sm:$0xff]
    %v1483 = vld [vmem:[%s1476 + $0x30] sm:$0xff]
    %v1484 = vld [vmem:[%s1476 + $0x38] sm:$0xff]
    %s1485 = scalar_lea.vmem %s13, 1
    %v1486 = vld [vmem:[%s1485] sm:$0x1]
    %v1488 = vperm.slane %v1486, 0
    %v1491 = vsel %vm826, %v1474, 0
    %v1494 = vsel %vm826, %v1475, 0
    %1496 = vmatpush.msra.mxu0 0.0
    %1497 = vmatpush.msra.mxu0 0.0
    %1498 = vmatpush.msra.mxu0 0.0
    %1499 = vmatpush.msra.mxu0 0.0
    %1500 = vmatpush.msra.mxu0 0.0
    %1501 = vmatpush.msra.mxu0 0.0
    %1502 = vmatpush.msra.mxu0 0.0
    %1503 = vmatpush.msra.mxu0 0.0
    %1504 = vmatpush.msra.mxu0 %v1484
    %1505 = vmatpush.msra.mxu0 %v1483
    %1506 = vmatpush.msra.mxu0 %v1482
    %1507 = vmatpush.msra.mxu0 %v1481
    %1508 = vmatpush.msra.mxu0 %v1480
    %1509 = vmatpush.msra.mxu0 %v1479
    %1510 = vmatpush.msra.mxu0 %v1478
    %1511 = vmatpush.msra.mxu0 %v1477
    %1512 = vmatmul.f32.gmra.mxu0 %v1491
    %v1513 = vpop.f32.mrf.mxu0
    %v1514 = vadd.f32 %v1488, %v1513
    %1515 = vmatmul.f32.gmra.mxu0 %v1494
    %v1516 = vpop.f32.mrf.mxu0
    %v1517 = vadd.f32 %v1488, %v1516
    %1518 = vdwg.mxu0
    %v1519 = vadd.f32 %v1514, %v1347
    %v1520 = vadd.f32 %v1517, %v1348
    %s1521 = scalar_lea.vmem [#allocation11], 1
    %v1522 = vld [vmem:[%s1521] sm:$0x1]
    %s1523 = scalar_lea.vmem %s15, 1
    %v1524 = vld [vmem:[%s1523] sm:$0x1]
    %v1525 = vsel %vm189, %v1519, 0.0
    %1526 = vadd.xlane.f32.xlu0 %v1525
    %v1527 = vpop.xlane.xlu0 %1526
    %v1528 = vsel %vm189, %v1520, 0.0
    %1529 = vadd.xlane.f32.xlu0 %v1528
    %v1530 = vpop.xlane.xlu0 %1529
    %v1531 = vmul.f32 %v1527, %v202
    %v1532 = vmul.f32 %v1530, %v202
    %v1533 = vsub.f32 %v1519, %v1531
    %v1534 = vsub.f32 %v1520, %v1532
    %v1535 = vmul.f32 %v1533, %v1533
    %v1536 = vmul.f32 %v1534, %v1534
    %v1537 = vsel %vm189, %v1535, 0.0
    %1538 = vadd.xlane.f32.xlu0 %v1537
    %v1539 = vpop.xlane.xlu0 %1538
    %v1540 = vsel %vm189, %v1536, 0.0
    %1541 = vadd.xlane.f32.xlu0 %v1540
    %v1542 = vpop.xlane.xlu0 %1541
    %v1543 = vmul.f32 %v1539, %v202
    %v1544 = vmul.f32 %v1542, %v202
    %v1545 = vadd.f32 %v1543, 1e-12
    %v1546 = vadd.f32 %v1544, 1e-12
    %v1547 = vrsqrt.pop %v1545
    %v1548 = vmul.f32 %v1547, %v1545
    %v1549 = vmul.f32 %v1548, %v1547
    %v1550 = vmul.f32 0.5, %v1549
    %v1551 = vsub.f32 1.5, %v1550
    %v1552 = vmul.f32 %v1547, %v1551
    %vm1553 = vweird.f32 %v1545
    %vm1554 = vweird.f32 %v1547
    %vm1555 = vmor %vm1553, %vm1554
    %v1556 = vsel %vm1555, %v1547, %v1552
    %v1557 = vrsqrt.pop %v1546
    %v1558 = vmul.f32 %v1557, %v1546
    %v1559 = vmul.f32 %v1558, %v1557
    %v1560 = vmul.f32 0.5, %v1559
    %v1561 = vsub.f32 1.5, %v1560
    %v1562 = vmul.f32 %v1557, %v1561
    %vm1563 = vweird.f32 %v1546
    %vm1564 = vweird.f32 %v1557
    %vm1565 = vmor %vm1563, %vm1564
    %v1566 = vsel %vm1565, %v1557, %v1562
    %v1567 = vmul.f32 %v1533, %v1556
    %v1568 = vmul.f32 %v1534, %v1566
    %v1570 = vperm.slane %v1522, 0
    %v1572 = vmul.f32 %v1567, %v1570
    %v1573 = vmul.f32 %v1568, %v1570
    %v1575 = vperm.slane %v1524, 0
    %v1577 = vadd.f32 %v1572, %v1575
    %v1578 = vadd.f32 %v1573, %v1575
    %v1579 = vld [vmem:[#allocation13] sm:$0xff]
    %v1580 = vld [vmem:[#allocation13 + $0x8] sm:$0xff]
    %v1581 = vld [vmem:[#allocation13 + $0x10] sm:$0xff]
    %v1582 = vld [vmem:[#allocation13 + $0x18] sm:$0xff]
    %v1583 = vld [vmem:[%s17] sm:$0x1]
    %v1585 = vperm.slane %v1583, 0
    %v1589 = vrot.slane %v1578, 7
    %vm1590 = vcmask 1041409
    %v1591 = vsel %vm1590, %v1589, %v1577
    %v1592 = vsel %vm189, %v1591, 0
    %1594 = vmatpush.msra.mxu0 0.0
    %1595 = vmatpush.msra.mxu0 0.0
    %1596 = vmatpush.msra.mxu0 0.0
    %1597 = vmatpush.msra.mxu0 0.0
    %1598 = vmatpush.msra.mxu0 0.0
    %1599 = vmatpush.msra.mxu0 0.0
    %1600 = vmatpush.msra.mxu0 0.0
    %1601 = vmatpush.msra.mxu0 0.0
    %1602 = vmatpush.msra.mxu0 0.0
    %1603 = vmatpush.msra.mxu0 0.0
    %1604 = vmatpush.msra.mxu0 0.0
    %1605 = vmatpush.msra.mxu0 0.0
    %1606 = vmatpush.msra.mxu0 %v1582
    %1607 = vmatpush.msra.mxu0 %v1581
    %1608 = vmatpush.msra.mxu0 %v1580
    %1609 = vmatpush.msra.mxu0 %v1579
    %1610 = vmatmul.f32.gmra.mxu0 %v1592
    %v1611 = vpop.f32.mrf.mxu0
    %v1612 = vadd.f32 %v1585, %v1611
    %1613 = vdwg.mxu0
    %v1614 = vtanh.pop %v1612
    %v1615 = vld [vmem:[#allocation14] sm:$0xff]
    %v1616 = vld [vmem:[#allocation14 + $0x8] sm:$0xff]
    %v1617 = vld [vmem:[#allocation14 + $0x10] sm:$0xff]
    %v1618 = vld [vmem:[#allocation14 + $0x18] sm:$0xff]
    %v1619 = vld [vmem:[%s19] sm:$0x1]
    %v1621 = vperm.slane %v1619, 0
    %v1624 = vsel %vm189, %v1614, 0
    %1626 = vmatpush.msra.mxu0 0.0
    %1627 = vmatpush.msra.mxu0 0.0
    %1628 = vmatpush.msra.mxu0 0.0
    %1629 = vmatpush.msra.mxu0 0.0
    %1630 = vmatpush.msra.mxu0 0.0
    %1631 = vmatpush.msra.mxu0 0.0
    %1632 = vmatpush.msra.mxu0 0.0
    %1633 = vmatpush.msra.mxu0 0.0
    %1634 = vmatpush.msra.mxu0 0.0
    %1635 = vmatpush.msra.mxu0 0.0
    %1636 = vmatpush.msra.mxu0 0.0
    %1637 = vmatpush.msra.mxu0 0.0
    %1638 = vmatpush.msra.mxu0 %v1618
    %1639 = vmatpush.msra.mxu0 %v1617
    %1640 = vmatpush.msra.mxu0 %v1616
    %1641 = vmatpush.msra.mxu0 %v1615
    %1642 = vmatmul.f32.gmra.mxu0 %v1624
    %v1643 = vpop.f32.mrf.mxu0
    %v1644 = vadd.f32 %v1621, %v1643
    %1645 = vdwg.mxu0
    %1646 = vst [vmem:[#allocation16] sm:$0x3] %v1644
    // Predicated region
    $region114: #{tpu_custom_call.1} parent=1 // pred_check
      _
    $region115: #{tpu_custom_call.1} parent=1 // pred_check_branch
      %1648 = sbr.rel (0) target = $region117
    $region116: #{tpu_custom_call.1} parent=1 // pred_region
      %1650 = vsyncadd [#allocation4], 0
      %s1652 = sshll.u32 [#allocation16], 4
      %s1653 = int_to_ptr.vmem [resolvable:$true] %s1652
      %s1654 = sshll.u32 %s20, 4
      %s1655 = int_to_ptr.hbm [resolvable:$true] %s1654
      %1657 = dma.vmem_to_hbm [thread:$0]  %s1653, 32, %s1655, [#allocation4]
    $region117: #{tpu_custom_call.1} parent=1 // pred_fallthru
      _
    // Predicated region
    $region118: #{tpu_custom_call.1} parent=1 // pred_check
      _
    $region119: #{tpu_custom_call.1} parent=1 // pred_check_branch
      %1659 = sbr.rel (0) target = $region121
    $region120: #{tpu_custom_call.1} parent=1 // pred_region
      %1661 = dma.done [#allocation4], 32
    $region121: #{tpu_custom_call.1} parent=1 // pred_fallthru
      _
    %1662 = vsyncpa [#allocation3], 1
    %1663 = vsyncpa [#allocation6], 1
    %1664 = vsyncpa [#allocation9], 1
    %1665 = vsyncpa [#allocation12], 1
    %1666 = vsyncpa [#allocation15], 1
    %1667 = vsyncpa [#allocation4], 1

</llo_original>
